<compile_context>
chip_gen: v5e
topology: v5e:2x2
jax: 0.10.0
libtpu: 0.0.40
codegen_flags: <defaults>
</compile_context>

<pallas_src>
import jax
import jax.numpy as jnp
from jax.experimental import pallas as pl
from jax.experimental.pallas import tpu as pltpu


def outcome_head_kernel(t_ref, f_ref, w1_ref, b1_ref, w2_ref, b2_ref, o_ref):
    """Fused forward: concat -> Linear -> ReLU -> Linear -> + intercept."""
    t = t_ref[...]                 # (TB, 1)  treatment column (batch tile)
    f = f_ref[...]                 # (TB, F)  features (batch tile)
    w1_t = w1_ref[0:1, :]          # (1, H)   W1 row acting on the treatment
    w1_f = w1_ref[1:, :]           # (F, H)   W1 rows acting on the features
    b1 = b1_ref[...]               # (1, H)
    w2_row = w2_ref[...]           # (1, H)   second-layer weights, as a row
    b2 = b2_ref[0]                 # scalar:  bias2 + intercept (SMEM)

    # inputs @ W1  ==  t[:, None] * W1_t + features @ W1_f   (concat fused away)
    h = t * w1_t + jnp.dot(f, w1_f, preferred_element_type=jnp.float32) + b1
    h = jnp.maximum(h, 0.0)                                   # ReLU

    # (TB, H) @ (H, 1) as a VPU multiply + lane reduction (MXU stays free).
    out = jnp.sum(h * w2_row, axis=-1, keepdims=True) + b2
    o_ref[...] = out.astype(o_ref.dtype)


def outcome_head_forward(treatment, features, params, *, block_b=512):
    """treatment: (B,) f32, features: (B, F) f32 -> (B, 1) f32."""
    B, F = features.shape
    H = params["w1"].shape[1]

    t2d = treatment.reshape(B, 1).astype(jnp.float32)
    feats = features.astype(jnp.float32)
    # Fold the scalar intercept into the second-layer bias -> single SMEM scalar.
    b2_icpt = (params["b2"].reshape(()) + params["intercept"].reshape(())).reshape(1)
    w2_row = params["w2"].reshape(1, H).astype(jnp.float32)

    # Batch tile: full batch if small, otherwise >=512-row tiles (trailing
    # partial block is padded by Pallas; no in-kernel batch reduction, so safe).
    tb = B if B <= block_b else block_b
    grid = (pl.cdiv(B, tb),)

    return pl.pallas_call(
        outcome_head_kernel,
        out_shape=jax.ShapeDtypeStruct((B, 1), jnp.float32),
        grid=grid,
        in_specs=[
            pl.BlockSpec((tb, 1), lambda i: (i, 0)),         # treatment (tiled)
            pl.BlockSpec((tb, F), lambda i: (i, 0)),         # features  (tiled)
            pl.BlockSpec((1 + F, H), lambda i: (0, 0)),      # W1   (resident)
            pl.BlockSpec((1, H), lambda i: (0, 0)),          # b1   (resident)
            pl.BlockSpec((1, H), lambda i: (0, 0)),          # w2^T (resident)
            pl.BlockSpec(memory_space=pltpu.MemorySpace.SMEM),  # b2 + intercept
        ],
        out_specs=pl.BlockSpec((tb, 1), lambda i: (i, 0)),
        compiler_params=pltpu.CompilerParams(
            dimension_semantics=("parallel",),   # v7x: shard batch grid over 2 TCs
        ),
    )(t2d, feats, params["w1"], params["b1"], w2_row, b2_icpt)


def init_params(key, feat_dim, hidden_dim):
    """Deterministic synthetic parameters matching the module's shapes."""
    k1, k2, k3, k4 = jax.random.split(key, 4)
    in_dim = 1 + feat_dim
    w1 = jax.random.normal(k1, (in_dim, hidden_dim), jnp.float32) / jnp.sqrt(in_dim)
    b1 = jax.random.normal(k2, (1, hidden_dim), jnp.float32) * 0.01
    w2 = jax.random.normal(k3, (hidden_dim, 1), jnp.float32) / jnp.sqrt(hidden_dim)
    b2 = jax.random.normal(k4, (1, 1), jnp.float32) * 0.01
    return {
        "w1": w1,                                   # (1+F, H) full first-layer weights
        "b1": b1,                                   # (1, H)
        "w2": w2,                                   # (H, 1)
        "b2": b2,                                   # (1, 1)
        "intercept": jnp.zeros((), jnp.float32),    # nn.Parameter(torch.tensor(0.0))
    }


def reference_forward(treatment, features, params):
    """Plain-JAX reference identical to the PyTorch forward semantics."""
    inputs = jnp.concatenate([treatment[:, None], features], axis=1)
    h = jnp.maximum(inputs @ params["w1"] + params["b1"], 0.0)
    return h @ params["w2"] + params["b2"] + params["intercept"]


if __name__ == "__main__":
    key = jax.random.PRNGKey(0)
    k_t, k_f, k_p = jax.random.split(key, 3)

    # Small shapes consistent with the module; B chosen to exercise the batch
    # grid (two 512-row tiles) while staying tiny (~32 KiB of data).
    B, F, H = 1024, 7, 32
    treatment = jax.random.uniform(k_t, (B,), jnp.float32)
    features = jax.random.normal(k_f, (B, F), jnp.float32)
    params = init_params(k_p, F, H)

    out = outcome_head_forward(treatment, features, params)
    out = jax.block_until_ready(out)

    ref = reference_forward(treatment, features, params)
    assert out.shape == (B, 1)
    assert jnp.allclose(out, ref, atol=1e-4, rtol=1e-4), (
        float(jnp.max(jnp.abs(out - ref))))

    print("KERNEL_OK")
</pallas_src>

<mosaic_0001>
module attributes {stable_mosaic.version = 11 : i64} {
  func.func @outcome_head_kernel(%arg0: i32, %arg1: memref<512x1xf32, #tpu.memory_space<vmem>>, %arg2: memref<512x7xf32, #tpu.memory_space<vmem>>, %arg3: memref<8x32xf32, #tpu.memory_space<vmem>>, %arg4: memref<1x32xf32, #tpu.memory_space<vmem>>, %arg5: memref<1x32xf32, #tpu.memory_space<vmem>>, %arg6: memref<1xf32, #tpu.memory_space<smem>>, %arg7: memref<512x1xf32, #tpu.memory_space<vmem>>) attributes {dimension_semantics = [#tpu.dimension_semantics<parallel>], iteration_bounds = array<i64: 2>, scalar_prefetch = 0 : i64, scratch_operands = 0 : i64, tpu.core_type = #tpu.core_type<tc>, window_params = [{transform_indices = @transform_0, window_bounds = array<i64: 512, 1>}, {transform_indices = @transform_1, window_bounds = array<i64: 512, 7>}, {pipeline_mode = #tpu.pipeline_mode<synchronous>, transform_indices = @transform_2, window_bounds = array<i64: 8, 32>}, {pipeline_mode = #tpu.pipeline_mode<synchronous>, transform_indices = @transform_3, window_bounds = array<i64: 1, 32>}, {pipeline_mode = #tpu.pipeline_mode<synchronous>, transform_indices = @transform_4, window_bounds = array<i64: 1, 32>}, {transform_indices = @transform_5, window_bounds = array<i64: 1>}, {transform_indices = @transform_6, window_bounds = array<i64: 512, 1>}]} {
    %c0 = arith.constant 0 : index
    %c0_0 = arith.constant 0 : index
    %0 = vector.load %arg1[%c0, %c0_0] : memref<512x1xf32, #tpu.memory_space<vmem>>, vector<512x1xf32>
    %c0_1 = arith.constant 0 : index
    %c0_2 = arith.constant 0 : index
    %1 = vector.load %arg2[%c0_1, %c0_2] : memref<512x7xf32, #tpu.memory_space<vmem>>, vector<512x7xf32>
    %c0_3 = arith.constant 0 : index
    %c0_4 = arith.constant 0 : index
    %2 = vector.load %arg3[%c0_3, %c0_4] : memref<8x32xf32, #tpu.memory_space<vmem>>, vector<1x32xf32>
    %c1 = arith.constant 1 : index
    %c0_5 = arith.constant 0 : index
    %3 = vector.load %arg3[%c1, %c0_5] : memref<8x32xf32, #tpu.memory_space<vmem>>, vector<7x32xf32>
    %c0_6 = arith.constant 0 : index
    %c0_7 = arith.constant 0 : index
    %4 = vector.load %arg4[%c0_6, %c0_7] : memref<1x32xf32, #tpu.memory_space<vmem>>, vector<1x32xf32>
    %c0_8 = arith.constant 0 : index
    %c0_9 = arith.constant 0 : index
    %5 = vector.load %arg5[%c0_8, %c0_9] : memref<1x32xf32, #tpu.memory_space<vmem>>, vector<1x32xf32>
    %c0_10 = arith.constant 0 : index
    %6 = memref.load %arg6[%c0_10] : memref<1xf32, #tpu.memory_space<smem>>
    %7 = vector.broadcast %0 : vector<512x1xf32> to vector<512x32xf32>
    %8 = vector.broadcast %2 : vector<1x32xf32> to vector<512x32xf32>
    %9 = arith.mulf %7, %8 : vector<512x32xf32>
    %cst = arith.constant dense<0.000000e+00> : vector<512x32xf32>
    %10 = tpu.matmul %1, %3, %cst {dimension_numbers = #tpu.dot_dimension_numbers<[1], [0], [0], [1], [0, 0, 1, 1], [], []>} : vector<512x7xf32>, vector<7x32xf32>, vector<512x32xf32> -> vector<512x32xf32>
    %11 = arith.addf %9, %10 : vector<512x32xf32>
    %12 = vector.broadcast %4 : vector<1x32xf32> to vector<512x32xf32>
    %13 = arith.addf %11, %12 : vector<512x32xf32>
    %cst_11 = arith.constant 0.000000e+00 : f32
    %14 = vector.broadcast %cst_11 : f32 to vector<512x32xf32>
    %15 = arith.maximumf %13, %14 : vector<512x32xf32>
    %16 = vector.broadcast %5 : vector<1x32xf32> to vector<512x32xf32>
    %17 = arith.mulf %15, %16 : vector<512x32xf32>
    %cst_12 = arith.constant dense<0.000000e+00> : vector<512xf32>
    %18 = vector.multi_reduction <add>, %17, %cst_12 [1] : vector<512x32xf32> to vector<512xf32>
    %19 = vector.shape_cast %18 : vector<512xf32> to vector<512x1xf32>
    %20 = vector.broadcast %6 : f32 to vector<512x1xf32>
    %21 = arith.addf %19, %20 : vector<512x1xf32>
    %c0_13 = arith.constant 0 : index
    %c0_14 = arith.constant 0 : index
    %22 = vector.load %arg7[%c0_13, %c0_14] : memref<512x1xf32, #tpu.memory_space<vmem>>, vector<512x1xf32>
    tpu.vector_store %arg7[%c0_13, %c0_14], %21 {strides = array<i32>} : memref<512x1xf32, #tpu.memory_space<vmem>>, vector<512x1xf32>,
    return
  }
  func.func @transform_0(%arg0: i32) -> (i32, i32) {
    %c0_i32 = arith.constant 0 : i32
    %c0_i32_0 = arith.constant 0 : i32
    return %arg0, %c0_i32 : i32, i32
  }
  func.func @transform_1(%arg0: i32) -> (i32, i32) {
    %c0_i32 = arith.constant 0 : i32
    %c0_i32_0 = arith.constant 0 : i32
    return %arg0, %c0_i32 : i32, i32
  }
  func.func @transform_2(%arg0: i32) -> (i32, i32) {
    %c0_i32 = arith.constant 0 : i32
    %c0_i32_0 = arith.constant 0 : i32
    %c0_i32_1 = arith.constant 0 : i32
    return %c0_i32, %c0_i32_0 : i32, i32
  }
  func.func @transform_3(%arg0: i32) -> (i32, i32) {
    %c0_i32 = arith.constant 0 : i32
    %c0_i32_0 = arith.constant 0 : i32
    %c0_i32_1 = arith.constant 0 : i32
    return %c0_i32, %c0_i32_0 : i32, i32
  }
  func.func @transform_4(%arg0: i32) -> (i32, i32) {
    %c0_i32 = arith.constant 0 : i32
    %c0_i32_0 = arith.constant 0 : i32
    %c0_i32_1 = arith.constant 0 : i32
    return %c0_i32, %c0_i32_0 : i32, i32
  }
  func.func @transform_5(%arg0: i32) -> i32 {
    %c0_i32 = arith.constant 0 : i32
    %c0_i32_0 = arith.constant 0 : i32
    return %c0_i32 : i32
  }
  func.func @transform_6(%arg0: i32) -> (i32, i32) {
    %c0_i32 = arith.constant 0 : i32
    %c0_i32_0 = arith.constant 0 : i32
    return %arg0, %c0_i32 : i32, i32
  }
}

</mosaic_0001>

<llo_original>
// kernel: tpu_custom_call.1
$region0: #{tpu_custom_call.1}
  #allocation0 [shape = 'u32[]', space=smem, size = 0x4, offset = 0x4, fixed_abs, tag = 'smem constant byte address 0x4 - core index']
  #allocation1 [shape = 'u32[72,128]{1,0:T(1,128)}', space=vmem, size = 0x9000, scoped, tag = 'internal scratch']
  #allocation2 [shape = 'f32[1]{0:T(128)S(6)}', space=smem, size = 0x200, scoped, tag = 'scoped memory for tpu_custom_call.1']
  %s0 = inlined_call_operand.vmem [shape: f32[1024,1], index: 0, kind: input, shape index: {}]
  %s1 = inlined_call_operand.vmem [shape: f32[1024,7], index: 1, kind: input, shape index: {}]
  %s2 = inlined_call_operand.vmem [shape: f32[8,32], index: 2, kind: input, shape index: {}]
  %s3 = inlined_call_operand.vmem [shape: f32[1,32], index: 3, kind: input, shape index: {}]
  %s4 = inlined_call_operand.vmem [shape: f32[1,32], index: 4, kind: input, shape index: {}]
  %s5 = inlined_call_operand.<no memory space> [shape: f32[1], index: 5, kind: input, shape index: {}]
  %s6 = inlined_call_operand.vmem [shape: f32[1024,1], index: 6, kind: output, shape index: {}]
  %s7 = sld [smem:[#allocation0]]
  $region57: #{tpu_custom_call.1} parent=0
    _
  %s9 = ssub.s32 1, %s7
  %s10 = scalar_select 0, %s9, %s7
  %11 = sst [smem:[#allocation2]] %s5
  loop: start=0, step=1, limit=4
  $region2: #{tpu_custom_call.1} parent=0 // loop_pre_header
    _
  $region3: #{tpu_custom_call.1} parent=0 // loop_header
    %s13 = sphi 0, %s17
    %p14 = scmp.ge.s32.totalorder %s13, 4
    %s23 = sphi 0, %s25
    %s26 = sphi 0, %s23
    %s27 = sphi 0, %s26
    %s43 = sphi 0, %s27
    %s49 = sphi 0, %s51
    %s52 = sphi 0, %s49
    %s53 = sphi 0, %s52
    %s69 = sphi 0, %s53
    %s73 = sphi 0, %s73
    %s75 = sphi 0, %s73
    %s76 = sphi 0, %s75
    %s90 = sphi 0, %s76
    %s94 = sphi 0, %s94
    %s96 = sphi 0, %s94
    %s97 = sphi 0, %s96
    %s111 = sphi 0, %s97
    %s115 = sphi 0, %s115
    %s117 = sphi 0, %s115
    %s118 = sphi 0, %s117
    %s132 = sphi 0, %s118
    %s136 = sphi 0, %s136
    %s138 = sphi 0, %s136
    %s139 = sphi 0, %s138
    %s153 = sphi 0, %s139
    %s159 = sphi 0, %s161
    %s162 = sphi 0, %s159
    %s163 = sphi 0, %s162
    %s179 = sphi 0, %s163
  $region4: #{tpu_custom_call.1} parent=0 // loop_header_branch
    %16 = sbr.rel (%p14) target = $region8
  $region5: #{tpu_custom_call.1} parent=0 // loop_body
    %s18 = ssub.s32 %s13, 1
    %s19 = ssub.s32 %s13, 2
    %s20 = sadd.s32 %s13, 1
    %s21 = ssub.s32 %s13, %s20
    %p22 = scmp.eq.s32.totalorder %s21, 0
    %s24 = sadd.s32 %s23, 1
    %s25 = scalar_select %p22, %s23, %s24
    %p28 = pneg %p22
    %p29 = scmp.eq.s32.totalorder %s13, 1
    %p30 = por %p28, %p29
    %p31 = scmp.ne.s32.totalorder %s23, %s26
    %p32 = scmp.eq.s32.totalorder %s13, 0
    %p33 = por %p31, %p32
    %p34 = scmp.ne.s32.totalorder %s23, %s26
    %p35 = scmp.eq.s32.totalorder %s18, 1
    %p36 = por %p34, %p35
    %p37 = scmp.ne.s32.totalorder %s26, %s27
    %p38 = scmp.eq.s32.totalorder %s18, 0
    %p39 = por %p37, %p38
    %p40 = scmp.ne.s32.totalorder %s26, %s27
    %p41 = scmp.eq.s32.totalorder %s19, 1
    %p42 = por %p40, %p41
    %p44 = scmp.ne.s32.totalorder %s27, %s43
    %p45 = scmp.eq.s32.totalorder %s19, 0
    %p46 = por %p44, %p45
    %s47 = ssub.s32 %s13, %s20
    %p48 = scmp.eq.s32.totalorder %s47, 0
    %s50 = sadd.s32 %s49, 1
    %s51 = scalar_select %p48, %s49, %s50
    %p54 = pneg %p48
    %p55 = scmp.eq.s32.totalorder %s13, 1
    %p56 = por %p54, %p55
    %p57 = scmp.ne.s32.totalorder %s49, %s52
    %p58 = scmp.eq.s32.totalorder %s13, 0
    %p59 = por %p57, %p58
    %p60 = scmp.ne.s32.totalorder %s49, %s52
    %p61 = scmp.eq.s32.totalorder %s18, 1
    %p62 = por %p60, %p61
    %p63 = scmp.ne.s32.totalorder %s52, %s53
    %p64 = scmp.eq.s32.totalorder %s18, 0
    %p65 = por %p63, %p64
    %p66 = scmp.ne.s32.totalorder %s52, %s53
    %p67 = scmp.eq.s32.totalorder %s19, 1
    %p68 = por %p66, %p67
    %p70 = scmp.ne.s32.totalorder %s53, %s69
    %p71 = scmp.eq.s32.totalorder %s19, 0
    %p72 = por %p70, %p71
    %s74 = sadd.s32 %s73, 1
    %p77 = scmp.eq.s32.totalorder %s13, 1
    %p78 = scmp.ne.s32.totalorder %s73, %s75
    %p79 = scmp.eq.s32.totalorder %s13, 0
    %p80 = por %p78, %p79
    %p81 = scmp.ne.s32.totalorder %s73, %s75
    %p82 = scmp.eq.s32.totalorder %s18, 1
    %p83 = por %p81, %p82
    %p84 = scmp.ne.s32.totalorder %s75, %s76
    %p85 = scmp.eq.s32.totalorder %s18, 0
    %p86 = por %p84, %p85
    %p87 = scmp.ne.s32.totalorder %s75, %s76
    %p88 = scmp.eq.s32.totalorder %s19, 1
    %p89 = por %p87, %p88
    %p91 = scmp.ne.s32.totalorder %s76, %s90
    %p92 = scmp.eq.s32.totalorder %s19, 0
    %p93 = por %p91, %p92
    %s95 = sadd.s32 %s94, 1
    %p98 = scmp.eq.s32.totalorder %s13, 1
    %p99 = scmp.ne.s32.totalorder %s94, %s96
    %p100 = scmp.eq.s32.totalorder %s13, 0
    %p101 = por %p99, %p100
    %p102 = scmp.ne.s32.totalorder %s94, %s96
    %p103 = scmp.eq.s32.totalorder %s18, 1
    %p104 = por %p102, %p103
    %p105 = scmp.ne.s32.totalorder %s96, %s97
    %p106 = scmp.eq.s32.totalorder %s18, 0
    %p107 = por %p105, %p106
    %p108 = scmp.ne.s32.totalorder %s96, %s97
    %p109 = scmp.eq.s32.totalorder %s19, 1
    %p110 = por %p108, %p109
    %p112 = scmp.ne.s32.totalorder %s97, %s111
    %p113 = scmp.eq.s32.totalorder %s19, 0
    %p114 = por %p112, %p113
    %s116 = sadd.s32 %s115, 1
    %p119 = scmp.eq.s32.totalorder %s13, 1
    %p120 = scmp.ne.s32.totalorder %s115, %s117
    %p121 = scmp.eq.s32.totalorder %s13, 0
    %p122 = por %p120, %p121
    %p123 = scmp.ne.s32.totalorder %s115, %s117
    %p124 = scmp.eq.s32.totalorder %s18, 1
    %p125 = por %p123, %p124
    %p126 = scmp.ne.s32.totalorder %s117, %s118
    %p127 = scmp.eq.s32.totalorder %s18, 0
    %p128 = por %p126, %p127
    %p129 = scmp.ne.s32.totalorder %s117, %s118
    %p130 = scmp.eq.s32.totalorder %s19, 1
    %p131 = por %p129, %p130
    %p133 = scmp.ne.s32.totalorder %s118, %s132
    %p134 = scmp.eq.s32.totalorder %s19, 0
    %p135 = por %p133, %p134
    %s137 = sadd.s32 %s136, 1
    %p140 = scmp.eq.s32.totalorder %s13, 1
    %p141 = scmp.ne.s32.totalorder %s136, %s138
    %p142 = scmp.eq.s32.totalorder %s13, 0
    %p143 = por %p141, %p142
    %p144 = scmp.ne.s32.totalorder %s136, %s138
    %p145 = scmp.eq.s32.totalorder %s18, 1
    %p146 = por %p144, %p145
    %p147 = scmp.ne.s32.totalorder %s138, %s139
    %p148 = scmp.eq.s32.totalorder %s18, 0
    %p149 = por %p147, %p148
    %p150 = scmp.ne.s32.totalorder %s138, %s139
    %p151 = scmp.eq.s32.totalorder %s19, 1
    %p152 = por %p150, %p151
    %p154 = scmp.ne.s32.totalorder %s139, %s153
    %p155 = scmp.eq.s32.totalorder %s19, 0
    %p156 = por %p154, %p155
    %s157 = ssub.s32 %s13, %s20
    %p158 = scmp.eq.s32.totalorder %s157, 0
    %s160 = sadd.s32 %s159, 1
    %s161 = scalar_select %p158, %s159, %s160
    %p164 = pneg %p158
    %p165 = scmp.eq.s32.totalorder %s13, 1
    %p166 = por %p164, %p165
    %p167 = scmp.ne.s32.totalorder %s159, %s162
    %p168 = scmp.eq.s32.totalorder %s13, 0
    %p169 = por %p167, %p168
    %p170 = scmp.ne.s32.totalorder %s159, %s162
    %p171 = scmp.eq.s32.totalorder %s18, 1
    %p172 = por %p170, %p171
    %p173 = scmp.ne.s32.totalorder %s162, %s163
    %p174 = scmp.eq.s32.totalorder %s18, 0
    %p175 = por %p173, %p174
    %p176 = scmp.ne.s32.totalorder %s162, %s163
    %p177 = scmp.eq.s32.totalorder %s19, 1
    %p178 = por %p176, %p177
    %p180 = scmp.ne.s32.totalorder %s163, %s179
    %p181 = scmp.eq.s32.totalorder %s19, 0
    %p182 = por %p180, %p181
    %p183 = scmp.le.s32.totalorder 1, %s13
    %p184 = scmp.lt.s32.totalorder %s13, 3
    %p185 = pnand %p183, %p184
    %p186 = pneg %p185
    // Predicated region
    $region9: #{tpu_custom_call.1} parent=5 // pred_check
      _
    $region10: #{tpu_custom_call.1} parent=5 // pred_check_branch
      %188 = sbr.rel (%p185) target = $region12
    $region11: #{tpu_custom_call.1} parent=5 // pred_region
      %s189 = ssub.s32 %s13, 1
      // Predicated region
      $region13: #{tpu_custom_call.1} parent=11 // pred_check
        %p190 = pneg %p86
      $region14: #{tpu_custom_call.1} parent=11 // pred_check_branch
        %192 = sbr.rel (%p190) target = $region16
      $region15: #{tpu_custom_call.1} parent=11 // pred_region
        _
      $region16: #{tpu_custom_call.1} parent=11 // pred_fallthru
        _
      // Predicated region
      $region17: #{tpu_custom_call.1} parent=11 // pred_check
        %p193 = pneg %p107
      $region18: #{tpu_custom_call.1} parent=11 // pred_check_branch
        %195 = sbr.rel (%p193) target = $region20
      $region19: #{tpu_custom_call.1} parent=11 // pred_region
        _
      $region20: #{tpu_custom_call.1} parent=11 // pred_fallthru
        _
      // Predicated region
      $region21: #{tpu_custom_call.1} parent=11 // pred_check
        %p196 = pneg %p128
      $region22: #{tpu_custom_call.1} parent=11 // pred_check_branch
        %198 = sbr.rel (%p196) target = $region24
      $region23: #{tpu_custom_call.1} parent=11 // pred_region
        _
      $region24: #{tpu_custom_call.1} parent=11 // pred_fallthru
        _
      // Predicated region
      $region25: #{tpu_custom_call.1} parent=11 // pred_check
        %p199 = pneg %p149
      $region26: #{tpu_custom_call.1} parent=11 // pred_check_branch
        %201 = sbr.rel (%p199) target = $region28
      $region27: #{tpu_custom_call.1} parent=11 // pred_region
        _
      $region28: #{tpu_custom_call.1} parent=11 // pred_fallthru
        _
    $region12: #{tpu_custom_call.1} parent=5 // pred_fallthru
      _
    %p202 = scmp.lt.s32.totalorder %s13, 2
    // Predicated region
    $region29: #{tpu_custom_call.1} parent=5 // pred_check
      %p203 = pneg %p202
    $region30: #{tpu_custom_call.1} parent=5 // pred_check_branch
      %205 = sbr.rel (%p203) target = $region32
    $region31: #{tpu_custom_call.1} parent=5 // pred_region
      // Predicated region
      $region33: #{tpu_custom_call.1} parent=31 // pred_check
        %p206 = pneg %p33
      $region34: #{tpu_custom_call.1} parent=31 // pred_check_branch
        %208 = sbr.rel (%p206) target = $region36
      $region35: #{tpu_custom_call.1} parent=31 // pred_region
        %s209 = smul.u32 64, %s13
        %p210 = scmp.lt.s32.totalorder %s209, 127
        %s211 = scalar_select %p210, %s209, 127
        %s212 = smul.addr %s211, 8
        %s213 = scalar_lea.vmem %s0, %s212
        %s214 = smul.u32 64, %s13
      $region36: #{tpu_custom_call.1} parent=31 // pred_fallthru
        _
      // Predicated region
      $region37: #{tpu_custom_call.1} parent=31 // pred_check
        %p215 = pneg %p59
      $region38: #{tpu_custom_call.1} parent=31 // pred_check_branch
        %217 = sbr.rel (%p215) target = $region40
      $region39: #{tpu_custom_call.1} parent=31 // pred_region
        %s218 = smul.u32 64, %s13
        %p219 = scmp.lt.s32.totalorder %s218, 127
        %s220 = scalar_select %p219, %s218, 127
        %s221 = smul.addr %s220, 8
        %s222 = scalar_lea.vmem %s1, %s221
        %s223 = smul.u32 64, %s13
      $region40: #{tpu_custom_call.1} parent=31 // pred_fallthru
        _
    $region32: #{tpu_custom_call.1} parent=5 // pred_fallthru
      _
    %p224 = scmp.le.s32.totalorder 1, %s13
    %p225 = scmp.lt.s32.totalorder %s13, 3
    %p226 = pnand %p224, %p225
    %p227 = pneg %p226
    // Predicated region
    $region41: #{tpu_custom_call.1} parent=5 // pred_check
      _
    $region42: #{tpu_custom_call.1} parent=5 // pred_check_branch
      %229 = sbr.rel (%p226) target = $region44
    $region43: #{tpu_custom_call.1} parent=5 // pred_region
      %s230 = ssub.s32 %s13, 1
      %s231 = smul.u32 64, %s18
      %p232 = scmp.lt.s32.totalorder %s231, 127
      %s233 = scalar_select %p232, %s231, 127
      %s234 = smul.addr %s233, 8
      %s235 = scalar_lea.vmem %s0, %s234
      %p236 = pneg %p39
      %p237 = pneg %p36
      %s238 = smul.u32 64, %s18
      %p239 = scmp.lt.s32.totalorder %s238, 127
      %s240 = scalar_select %p239, %s238, 127
      %s241 = smul.addr %s240, 8
      %s242 = scalar_lea.vmem %s1, %s241
      %p243 = pneg %p65
      %p244 = pneg %p62
      %p245 = pneg %p86
      %p246 = pneg %p83
      %p247 = pneg %p107
      %p248 = pneg %p104
      %p249 = pneg %p128
      %p250 = pneg %p125
      %p251 = pneg %p149
      %p252 = pneg %p146
      %p253 = pneg %p175
      %p254 = pneg %p172
      %s255 = smul.u32 64, %s18
      %p256 = scmp.lt.s32.totalorder %s255, 127
      %s257 = scalar_select %p256, %s255, 127
      %s258 = smul.addr %s257, 8
      %s259 = scalar_lea.vmem %s6, %s258
      %s260 = smul.u32 64, %s18
      %p261 = scmp.lt.s32.totalorder %s260, 127
      %s262 = scalar_select %p261, %s260, 127
      %s263 = smul.addr %s262, 8
      %s264 = scalar_lea.vmem %s0, %s263
      %s265 = smul.u32 64, %s18
      %s266 = smul.u32 64, %s18
      %p267 = scmp.lt.s32.totalorder %s266, 127
      %s268 = scalar_select %p267, %s266, 127
      %s269 = smul.addr %s268, 8
      %s270 = scalar_lea.vmem %s1, %s269
      %s271 = smul.u32 64, %s18
      %s272 = smul.u32 64, %s18
      %p273 = scmp.lt.s32.totalorder %s272, 127
      %s274 = scalar_select %p273, %s272, 127
      %s275 = smul.addr %s274, 8
      %s276 = scalar_lea.vmem %s6, %s275
      %s277 = smul.u32 64, %s18
      %v278 = vld [vmem:[%s264] sm:$0xff]
      %v279 = vld [vmem:[%s264 + $0x8] sm:$0xff]
      %v280 = vld [vmem:[%s264 + $0x10] sm:$0xff]
      %v281 = vld [vmem:[%s264 + $0x18] sm:$0xff]
      %v282 = vld [vmem:[%s264 + $0x20] sm:$0xff]
      %v283 = vld [vmem:[%s264 + $0x28] sm:$0xff]
      %v284 = vld [vmem:[%s264 + $0x30] sm:$0xff]
      %v285 = vld [vmem:[%s264 + $0x38] sm:$0xff]
      %v286 = vld [vmem:[%s264 + $0x40] sm:$0xff]
      %v287 = vld [vmem:[%s264 + $0x48] sm:$0xff]
      %v288 = vld [vmem:[%s264 + $0x50] sm:$0xff]
      %v289 = vld [vmem:[%s264 + $0x58] sm:$0xff]
      %v290 = vld [vmem:[%s264 + $0x60] sm:$0xff]
      %v291 = vld [vmem:[%s264 + $0x68] sm:$0xff]
      %v292 = vld [vmem:[%s264 + $0x70] sm:$0xff]
      %v293 = vld [vmem:[%s264 + $0x78] sm:$0xff]
      %v294 = vld [vmem:[%s264 + $0x80] sm:$0xff]
      %v295 = vld [vmem:[%s264 + $0x88] sm:$0xff]
      %v296 = vld [vmem:[%s264 + $0x90] sm:$0xff]
      %v297 = vld [vmem:[%s264 + $0x98] sm:$0xff]
      %v298 = vld [vmem:[%s264 + $0xa0] sm:$0xff]
      %v299 = vld [vmem:[%s264 + $0xa8] sm:$0xff]
      %v300 = vld [vmem:[%s264 + $0xb0] sm:$0xff]
      %v301 = vld [vmem:[%s264 + $0xb8] sm:$0xff]
      %v302 = vld [vmem:[%s264 + $0xc0] sm:$0xff]
      %v303 = vld [vmem:[%s264 + $0xc8] sm:$0xff]
      %v304 = vld [vmem:[%s264 + $0xd0] sm:$0xff]
      %v305 = vld [vmem:[%s264 + $0xd8] sm:$0xff]
      %v306 = vld [vmem:[%s264 + $0xe0] sm:$0xff]
      %v307 = vld [vmem:[%s264 + $0xe8] sm:$0xff]
      %v308 = vld [vmem:[%s264 + $0xf0] sm:$0xff]
      %v309 = vld [vmem:[%s264 + $0xf8] sm:$0xff]
      %v310 = vld [vmem:[%s264 + $0x100] sm:$0xff]
      %v311 = vld [vmem:[%s264 + $0x108] sm:$0xff]
      %v312 = vld [vmem:[%s264 + $0x110] sm:$0xff]
      %v313 = vld [vmem:[%s264 + $0x118] sm:$0xff]
      %v314 = vld [vmem:[%s264 + $0x120] sm:$0xff]
      %v315 = vld [vmem:[%s264 + $0x128] sm:$0xff]
      %v316 = vld [vmem:[%s264 + $0x130] sm:$0xff]
      %v317 = vld [vmem:[%s264 + $0x138] sm:$0xff]
      %v318 = vld [vmem:[%s264 + $0x140] sm:$0xff]
      %v319 = vld [vmem:[%s264 + $0x148] sm:$0xff]
      %v320 = vld [vmem:[%s264 + $0x150] sm:$0xff]
      %v321 = vld [vmem:[%s264 + $0x158] sm:$0xff]
      %v322 = vld [vmem:[%s264 + $0x160] sm:$0xff]
      %v323 = vld [vmem:[%s264 + $0x168] sm:$0xff]
      %v324 = vld [vmem:[%s264 + $0x170] sm:$0xff]
      %v325 = vld [vmem:[%s264 + $0x178] sm:$0xff]
      %v326 = vld [vmem:[%s264 + $0x180] sm:$0xff]
      %v327 = vld [vmem:[%s264 + $0x188] sm:$0xff]
      %v328 = vld [vmem:[%s264 + $0x190] sm:$0xff]
      %v329 = vld [vmem:[%s264 + $0x198] sm:$0xff]
      %v330 = vld [vmem:[%s264 + $0x1a0] sm:$0xff]
      %v331 = vld [vmem:[%s264 + $0x1a8] sm:$0xff]
      %v332 = vld [vmem:[%s264 + $0x1b0] sm:$0xff]
      %v333 = vld [vmem:[%s264 + $0x1b8] sm:$0xff]
      %v334 = vld [vmem:[%s264 + $0x1c0] sm:$0xff]
      %v335 = vld [vmem:[%s264 + $0x1c8] sm:$0xff]
      %v336 = vld [vmem:[%s264 + $0x1d0] sm:$0xff]
      %v337 = vld [vmem:[%s264 + $0x1d8] sm:$0xff]
      %v338 = vld [vmem:[%s264 + $0x1e0] sm:$0xff]
      %v339 = vld [vmem:[%s264 + $0x1e8] sm:$0xff]
      %v340 = vld [vmem:[%s264 + $0x1f0] sm:$0xff]
      %v341 = vld [vmem:[%s264 + $0x1f8] sm:$0xff]
      %v342 = vld [vmem:[%s270] sm:$0xff]
      %v343 = vld [vmem:[%s270 + $0x8] sm:$0xff]
      %v344 = vld [vmem:[%s270 + $0x10] sm:$0xff]
      %v345 = vld [vmem:[%s270 + $0x18] sm:$0xff]
      %v346 = vld [vmem:[%s270 + $0x20] sm:$0xff]
      %v347 = vld [vmem:[%s270 + $0x28] sm:$0xff]
      %v348 = vld [vmem:[%s270 + $0x30] sm:$0xff]
      %v349 = vld [vmem:[%s270 + $0x38] sm:$0xff]
      %v350 = vld [vmem:[%s270 + $0x40] sm:$0xff]
      %v351 = vld [vmem:[%s270 + $0x48] sm:$0xff]
      %v352 = vld [vmem:[%s270 + $0x50] sm:$0xff]
      %v353 = vld [vmem:[%s270 + $0x58] sm:$0xff]
      %v354 = vld [vmem:[%s270 + $0x60] sm:$0xff]
      %v355 = vld [vmem:[%s270 + $0x68] sm:$0xff]
      %v356 = vld [vmem:[%s270 + $0x70] sm:$0xff]
      %v357 = vld [vmem:[%s270 + $0x78] sm:$0xff]
      %v358 = vld [vmem:[%s270 + $0x80] sm:$0xff]
      %v359 = vld [vmem:[%s270 + $0x88] sm:$0xff]
      %v360 = vld [vmem:[%s270 + $0x90] sm:$0xff]
      %v361 = vld [vmem:[%s270 + $0x98] sm:$0xff]
      %v362 = vld [vmem:[%s270 + $0xa0] sm:$0xff]
      %v363 = vld [vmem:[%s270 + $0xa8] sm:$0xff]
      %v364 = vld [vmem:[%s270 + $0xb0] sm:$0xff]
      %v365 = vld [vmem:[%s270 + $0xb8] sm:$0xff]
      %v366 = vld [vmem:[%s270 + $0xc0] sm:$0xff]
      %v367 = vld [vmem:[%s270 + $0xc8] sm:$0xff]
      %v368 = vld [vmem:[%s270 + $0xd0] sm:$0xff]
      %v369 = vld [vmem:[%s270 + $0xd8] sm:$0xff]
      %v370 = vld [vmem:[%s270 + $0xe0] sm:$0xff]
      %v371 = vld [vmem:[%s270 + $0xe8] sm:$0xff]
      %v372 = vld [vmem:[%s270 + $0xf0] sm:$0xff]
      %v373 = vld [vmem:[%s270 + $0xf8] sm:$0xff]
      %v374 = vld [vmem:[%s270 + $0x100] sm:$0xff]
      %v375 = vld [vmem:[%s270 + $0x108] sm:$0xff]
      %v376 = vld [vmem:[%s270 + $0x110] sm:$0xff]
      %v377 = vld [vmem:[%s270 + $0x118] sm:$0xff]
      %v378 = vld [vmem:[%s270 + $0x120] sm:$0xff]
      %v379 = vld [vmem:[%s270 + $0x128] sm:$0xff]
      %v380 = vld [vmem:[%s270 + $0x130] sm:$0xff]
      %v381 = vld [vmem:[%s270 + $0x138] sm:$0xff]
      %v382 = vld [vmem:[%s270 + $0x140] sm:$0xff]
      %v383 = vld [vmem:[%s270 + $0x148] sm:$0xff]
      %v384 = vld [vmem:[%s270 + $0x150] sm:$0xff]
      %v385 = vld [vmem:[%s270 + $0x158] sm:$0xff]
      %v386 = vld [vmem:[%s270 + $0x160] sm:$0xff]
      %v387 = vld [vmem:[%s270 + $0x168] sm:$0xff]
      %v388 = vld [vmem:[%s270 + $0x170] sm:$0xff]
      %v389 = vld [vmem:[%s270 + $0x178] sm:$0xff]
      %v390 = vld [vmem:[%s270 + $0x180] sm:$0xff]
      %v391 = vld [vmem:[%s270 + $0x188] sm:$0xff]
      %v392 = vld [vmem:[%s270 + $0x190] sm:$0xff]
      %v393 = vld [vmem:[%s270 + $0x198] sm:$0xff]
      %v394 = vld [vmem:[%s270 + $0x1a0] sm:$0xff]
      %v395 = vld [vmem:[%s270 + $0x1a8] sm:$0xff]
      %v396 = vld [vmem:[%s270 + $0x1b0] sm:$0xff]
      %v397 = vld [vmem:[%s270 + $0x1b8] sm:$0xff]
      %v398 = vld [vmem:[%s270 + $0x1c0] sm:$0xff]
      %v399 = vld [vmem:[%s270 + $0x1c8] sm:$0xff]
      %v400 = vld [vmem:[%s270 + $0x1d0] sm:$0xff]
      %v401 = vld [vmem:[%s270 + $0x1d8] sm:$0xff]
      %v402 = vld [vmem:[%s270 + $0x1e0] sm:$0xff]
      %v403 = vld [vmem:[%s270 + $0x1e8] sm:$0xff]
      %v404 = vld [vmem:[%s270 + $0x1f0] sm:$0xff]
      %v405 = vld [vmem:[%s270 + $0x1f8] sm:$0xff]
      %v406 = vld [vmem:[%s2] sm:$0x1]
      %v407 = vld [vmem:[%s2 + $0x1] sm:$0x7f]
      %v408 = vld [vmem:[%s3] sm:$0x1]
      %v409 = vld [vmem:[%s4] sm:$0x1]
      %s410 = sld [smem:[#allocation2]]
      %412 = vset.pattern.permute.xlu0 0
      %413 = vperm.xlu0 %412, %v278
      %v414 = vpop.permute.xlu0 %413
      %417 = vset.pattern.permute.xlu0 0
      %418 = vperm.xlu0 %417, %v279
      %v419 = vpop.permute.xlu0 %418
      %422 = vset.pattern.permute.xlu0 0
      %423 = vperm.xlu0 %422, %v280
      %v424 = vpop.permute.xlu0 %423
      %427 = vset.pattern.permute.xlu0 0
      %428 = vperm.xlu0 %427, %v281
      %v429 = vpop.permute.xlu0 %428
      %432 = vset.pattern.permute.xlu0 0
      %433 = vperm.xlu0 %432, %v282
      %v434 = vpop.permute.xlu0 %433
      %437 = vset.pattern.permute.xlu0 0
      %438 = vperm.xlu0 %437, %v283
      %v439 = vpop.permute.xlu0 %438
      %442 = vset.pattern.permute.xlu0 0
      %443 = vperm.xlu0 %442, %v284
      %v444 = vpop.permute.xlu0 %443
      %447 = vset.pattern.permute.xlu0 0
      %448 = vperm.xlu0 %447, %v285
      %v449 = vpop.permute.xlu0 %448
      %452 = vset.pattern.permute.xlu0 0
      %453 = vperm.xlu0 %452, %v286
      %v454 = vpop.permute.xlu0 %453
      %457 = vset.pattern.permute.xlu0 0
      %458 = vperm.xlu0 %457, %v287
      %v459 = vpop.permute.xlu0 %458
      %462 = vset.pattern.permute.xlu0 0
      %463 = vperm.xlu0 %462, %v288
      %v464 = vpop.permute.xlu0 %463
      %467 = vset.pattern.permute.xlu0 0
      %468 = vperm.xlu0 %467, %v289
      %v469 = vpop.permute.xlu0 %468
      %472 = vset.pattern.permute.xlu0 0
      %473 = vperm.xlu0 %472, %v290
      %v474 = vpop.permute.xlu0 %473
      %477 = vset.pattern.permute.xlu0 0
      %478 = vperm.xlu0 %477, %v291
      %v479 = vpop.permute.xlu0 %478
      %482 = vset.pattern.permute.xlu0 0
      %483 = vperm.xlu0 %482, %v292
      %v484 = vpop.permute.xlu0 %483
      %487 = vset.pattern.permute.xlu0 0
      %488 = vperm.xlu0 %487, %v293
      %v489 = vpop.permute.xlu0 %488
      %492 = vset.pattern.permute.xlu0 0
      %493 = vperm.xlu0 %492, %v294
      %v494 = vpop.permute.xlu0 %493
      %497 = vset.pattern.permute.xlu0 0
      %498 = vperm.xlu0 %497, %v295
      %v499 = vpop.permute.xlu0 %498
      %502 = vset.pattern.permute.xlu0 0
      %503 = vperm.xlu0 %502, %v296
      %v504 = vpop.permute.xlu0 %503
      %507 = vset.pattern.permute.xlu0 0
      %508 = vperm.xlu0 %507, %v297
      %v509 = vpop.permute.xlu0 %508
      %512 = vset.pattern.permute.xlu0 0
      %513 = vperm.xlu0 %512, %v298
      %v514 = vpop.permute.xlu0 %513
      %517 = vset.pattern.permute.xlu0 0
      %518 = vperm.xlu0 %517, %v299
      %v519 = vpop.permute.xlu0 %518
      %522 = vset.pattern.permute.xlu0 0
      %523 = vperm.xlu0 %522, %v300
      %v524 = vpop.permute.xlu0 %523
      %527 = vset.pattern.permute.xlu0 0
      %528 = vperm.xlu0 %527, %v301
      %v529 = vpop.permute.xlu0 %528
      %532 = vset.pattern.permute.xlu0 0
      %533 = vperm.xlu0 %532, %v302
      %v534 = vpop.permute.xlu0 %533
      %537 = vset.pattern.permute.xlu0 0
      %538 = vperm.xlu0 %537, %v303
      %v539 = vpop.permute.xlu0 %538
      %542 = vset.pattern.permute.xlu0 0
      %543 = vperm.xlu0 %542, %v304
      %v544 = vpop.permute.xlu0 %543
      %547 = vset.pattern.permute.xlu0 0
      %548 = vperm.xlu0 %547, %v305
      %v549 = vpop.permute.xlu0 %548
      %552 = vset.pattern.permute.xlu0 0
      %553 = vperm.xlu0 %552, %v306
      %v554 = vpop.permute.xlu0 %553
      %557 = vset.pattern.permute.xlu0 0
      %558 = vperm.xlu0 %557, %v307
      %v559 = vpop.permute.xlu0 %558
      %562 = vset.pattern.permute.xlu0 0
      %563 = vperm.xlu0 %562, %v308
      %v564 = vpop.permute.xlu0 %563
      %567 = vset.pattern.permute.xlu0 0
      %568 = vperm.xlu0 %567, %v309
      %v569 = vpop.permute.xlu0 %568
      %572 = vset.pattern.permute.xlu0 0
      %573 = vperm.xlu0 %572, %v310
      %v574 = vpop.permute.xlu0 %573
      %577 = vset.pattern.permute.xlu0 0
      %578 = vperm.xlu0 %577, %v311
      %v579 = vpop.permute.xlu0 %578
      %582 = vset.pattern.permute.xlu0 0
      %583 = vperm.xlu0 %582, %v312
      %v584 = vpop.permute.xlu0 %583
      %587 = vset.pattern.permute.xlu0 0
      %588 = vperm.xlu0 %587, %v313
      %v589 = vpop.permute.xlu0 %588
      %592 = vset.pattern.permute.xlu0 0
      %593 = vperm.xlu0 %592, %v314
      %v594 = vpop.permute.xlu0 %593
      %597 = vset.pattern.permute.xlu0 0
      %598 = vperm.xlu0 %597, %v315
      %v599 = vpop.permute.xlu0 %598
      %602 = vset.pattern.permute.xlu0 0
      %603 = vperm.xlu0 %602, %v316
      %v604 = vpop.permute.xlu0 %603
      %607 = vset.pattern.permute.xlu0 0
      %608 = vperm.xlu0 %607, %v317
      %v609 = vpop.permute.xlu0 %608
      %612 = vset.pattern.permute.xlu0 0
      %613 = vperm.xlu0 %612, %v318
      %v614 = vpop.permute.xlu0 %613
      %617 = vset.pattern.permute.xlu0 0
      %618 = vperm.xlu0 %617, %v319
      %v619 = vpop.permute.xlu0 %618
      %622 = vset.pattern.permute.xlu0 0
      %623 = vperm.xlu0 %622, %v320
      %v624 = vpop.permute.xlu0 %623
      %627 = vset.pattern.permute.xlu0 0
      %628 = vperm.xlu0 %627, %v321
      %v629 = vpop.permute.xlu0 %628
      %632 = vset.pattern.permute.xlu0 0
      %633 = vperm.xlu0 %632, %v322
      %v634 = vpop.permute.xlu0 %633
      %637 = vset.pattern.permute.xlu0 0
      %638 = vperm.xlu0 %637, %v323
      %v639 = vpop.permute.xlu0 %638
      %642 = vset.pattern.permute.xlu0 0
      %643 = vperm.xlu0 %642, %v324
      %v644 = vpop.permute.xlu0 %643
      %647 = vset.pattern.permute.xlu0 0
      %648 = vperm.xlu0 %647, %v325
      %v649 = vpop.permute.xlu0 %648
      %652 = vset.pattern.permute.xlu0 0
      %653 = vperm.xlu0 %652, %v326
      %v654 = vpop.permute.xlu0 %653
      %657 = vset.pattern.permute.xlu0 0
      %658 = vperm.xlu0 %657, %v327
      %v659 = vpop.permute.xlu0 %658
      %662 = vset.pattern.permute.xlu0 0
      %663 = vperm.xlu0 %662, %v328
      %v664 = vpop.permute.xlu0 %663
      %667 = vset.pattern.permute.xlu0 0
      %668 = vperm.xlu0 %667, %v329
      %v669 = vpop.permute.xlu0 %668
      %672 = vset.pattern.permute.xlu0 0
      %673 = vperm.xlu0 %672, %v330
      %v674 = vpop.permute.xlu0 %673
      %677 = vset.pattern.permute.xlu0 0
      %678 = vperm.xlu0 %677, %v331
      %v679 = vpop.permute.xlu0 %678
      %682 = vset.pattern.permute.xlu0 0
      %683 = vperm.xlu0 %682, %v332
      %v684 = vpop.permute.xlu0 %683
      %687 = vset.pattern.permute.xlu0 0
      %688 = vperm.xlu0 %687, %v333
      %v689 = vpop.permute.xlu0 %688
      %692 = vset.pattern.permute.xlu0 0
      %693 = vperm.xlu0 %692, %v334
      %v694 = vpop.permute.xlu0 %693
      %697 = vset.pattern.permute.xlu0 0
      %698 = vperm.xlu0 %697, %v335
      %v699 = vpop.permute.xlu0 %698
      %702 = vset.pattern.permute.xlu0 0
      %703 = vperm.xlu0 %702, %v336
      %v704 = vpop.permute.xlu0 %703
      %707 = vset.pattern.permute.xlu0 0
      %708 = vperm.xlu0 %707, %v337
      %v709 = vpop.permute.xlu0 %708
      %712 = vset.pattern.permute.xlu0 0
      %713 = vperm.xlu0 %712, %v338
      %v714 = vpop.permute.xlu0 %713
      %717 = vset.pattern.permute.xlu0 0
      %718 = vperm.xlu0 %717, %v339
      %v719 = vpop.permute.xlu0 %718
      %722 = vset.pattern.permute.xlu0 0
      %723 = vperm.xlu0 %722, %v340
      %v724 = vpop.permute.xlu0 %723
      %727 = vset.pattern.permute.xlu0 0
      %728 = vperm.xlu0 %727, %v341
      %v729 = vpop.permute.xlu0 %728
      %v731 = vperm.slane %v406, 0
      %v732 = vmul.f32 %v414, %v731
      %v733 = vmul.f32 %v419, %v731
      %v734 = vmul.f32 %v424, %v731
      %v735 = vmul.f32 %v429, %v731
      %v736 = vmul.f32 %v434, %v731
      %v737 = vmul.f32 %v439, %v731
      %v738 = vmul.f32 %v444, %v731
      %v739 = vmul.f32 %v449, %v731
      %v740 = vmul.f32 %v454, %v731
      %v741 = vmul.f32 %v459, %v731
      %v742 = vmul.f32 %v464, %v731
      %v743 = vmul.f32 %v469, %v731
      %v744 = vmul.f32 %v474, %v731
      %v745 = vmul.f32 %v479, %v731
      %v746 = vmul.f32 %v484, %v731
      %v747 = vmul.f32 %v489, %v731
      %v748 = vmul.f32 %v494, %v731
      %v749 = vmul.f32 %v499, %v731
      %v750 = vmul.f32 %v504, %v731
      %v751 = vmul.f32 %v509, %v731
      %v752 = vmul.f32 %v514, %v731
      %v753 = vmul.f32 %v519, %v731
      %v754 = vmul.f32 %v524, %v731
      %v755 = vmul.f32 %v529, %v731
      %v756 = vmul.f32 %v534, %v731
      %v757 = vmul.f32 %v539, %v731
      %v758 = vmul.f32 %v544, %v731
      %v759 = vmul.f32 %v549, %v731
      %v760 = vmul.f32 %v554, %v731
      %v761 = vmul.f32 %v559, %v731
      %v762 = vmul.f32 %v564, %v731
      %v763 = vmul.f32 %v569, %v731
      %v764 = vmul.f32 %v574, %v731
      %v765 = vmul.f32 %v579, %v731
      %v766 = vmul.f32 %v584, %v731
      %v767 = vmul.f32 %v589, %v731
      %v768 = vmul.f32 %v594, %v731
      %v769 = vmul.f32 %v599, %v731
      %v770 = vmul.f32 %v604, %v731
      %v771 = vmul.f32 %v609, %v731
      %v772 = vmul.f32 %v614, %v731
      %v773 = vmul.f32 %v619, %v731
      %v774 = vmul.f32 %v624, %v731
      %v775 = vmul.f32 %v629, %v731
      %v776 = vmul.f32 %v634, %v731
      %v777 = vmul.f32 %v639, %v731
      %v778 = vmul.f32 %v644, %v731
      %v779 = vmul.f32 %v649, %v731
      %v780 = vmul.f32 %v654, %v731
      %v781 = vmul.f32 %v659, %v731
      %v782 = vmul.f32 %v664, %v731
      %v783 = vmul.f32 %v669, %v731
      %v784 = vmul.f32 %v674, %v731
      %v785 = vmul.f32 %v679, %v731
      %v786 = vmul.f32 %v684, %v731
      %v787 = vmul.f32 %v689, %v731
      %v788 = vmul.f32 %v694, %v731
      %v789 = vmul.f32 %v699, %v731
      %v790 = vmul.f32 %v704, %v731
      %v791 = vmul.f32 %v709, %v731
      %v792 = vmul.f32 %v714, %v731
      %v793 = vmul.f32 %v719, %v731
      %v794 = vmul.f32 %v724, %v731
      %v795 = vmul.f32 %v729, %v731
      %vm796 = vcmask 56320
      %v798 = vsel %vm796, %v342, 0
      %v801 = vsel %vm796, %v343, 0
      %v804 = vsel %vm796, %v344, 0
      %v807 = vsel %vm796, %v345, 0
      %v810 = vsel %vm796, %v346, 0
      %v813 = vsel %vm796, %v347, 0
      %v816 = vsel %vm796, %v348, 0
      %v819 = vsel %vm796, %v349, 0
      %v822 = vsel %vm796, %v350, 0
      %v825 = vsel %vm796, %v351, 0
      %v828 = vsel %vm796, %v352, 0
      %v831 = vsel %vm796, %v353, 0
      %v834 = vsel %vm796, %v354, 0
      %v837 = vsel %vm796, %v355, 0
      %v840 = vsel %vm796, %v356, 0
      %v843 = vsel %vm796, %v357, 0
      %v846 = vsel %vm796, %v358, 0
      %v849 = vsel %vm796, %v359, 0
      %v852 = vsel %vm796, %v360, 0
      %v855 = vsel %vm796, %v361, 0
      %v858 = vsel %vm796, %v362, 0
      %v861 = vsel %vm796, %v363, 0
      %v864 = vsel %vm796, %v364, 0
      %v867 = vsel %vm796, %v365, 0
      %v870 = vsel %vm796, %v366, 0
      %v873 = vsel %vm796, %v367, 0
      %v876 = vsel %vm796, %v368, 0
      %v879 = vsel %vm796, %v369, 0
      %v882 = vsel %vm796, %v370, 0
      %v885 = vsel %vm796, %v371, 0
      %v888 = vsel %vm796, %v372, 0
      %v891 = vsel %vm796, %v373, 0
      %v894 = vsel %vm796, %v374, 0
      %v897 = vsel %vm796, %v375, 0
      %v900 = vsel %vm796, %v376, 0
      %v903 = vsel %vm796, %v377, 0
      %v906 = vsel %vm796, %v378, 0
      %v909 = vsel %vm796, %v379, 0
      %v912 = vsel %vm796, %v380, 0
      %v915 = vsel %vm796, %v381, 0
      %v918 = vsel %vm796, %v382, 0
      %v921 = vsel %vm796, %v383, 0
      %v924 = vsel %vm796, %v384, 0
      %v927 = vsel %vm796, %v385, 0
      %v930 = vsel %vm796, %v386, 0
      %v933 = vsel %vm796, %v387, 0
      %v936 = vsel %vm796, %v388, 0
      %v939 = vsel %vm796, %v389, 0
      %v942 = vsel %vm796, %v390, 0
      %v945 = vsel %vm796, %v391, 0
      %v948 = vsel %vm796, %v392, 0
      %v951 = vsel %vm796, %v393, 0
      %v954 = vsel %vm796, %v394, 0
      %v957 = vsel %vm796, %v395, 0
      %v960 = vsel %vm796, %v396, 0
      %v963 = vsel %vm796, %v397, 0
      %v966 = vsel %vm796, %v398, 0
      %v969 = vsel %vm796, %v399, 0
      %v972 = vsel %vm796, %v400, 0
      %v975 = vsel %vm796, %v401, 0
      %v978 = vsel %vm796, %v402, 0
      %v981 = vsel %vm796, %v403, 0
      %v984 = vsel %vm796, %v404, 0
      %v987 = vsel %vm796, %v405, 0
      %vm989 = vcmask 1046528
      %v991 = vsel %vm989, %v407, 0
      %993 = vmatpush.msra.mxu0 0.0
      %994 = vmatpush.msra.mxu0 0.0
      %995 = vmatpush.msra.mxu0 0.0
      %996 = vmatpush.msra.mxu0 0.0
      %997 = vmatpush.msra.mxu0 0.0
      %998 = vmatpush.msra.mxu0 0.0
      %999 = vmatpush.msra.mxu0 0.0
      %1000 = vmatpush.msra.mxu0 0.0
      %1001 = vmatpush.msra.mxu0 0.0
      %1002 = vmatpush.msra.mxu0 0.0
      %1003 = vmatpush.msra.mxu0 0.0
      %1004 = vmatpush.msra.mxu0 0.0
      %1005 = vmatpush.msra.mxu0 0.0
      %1006 = vmatpush.msra.mxu0 0.0
      %1007 = vmatpush.msra.mxu0 0.0
      %1008 = vmatpush.msra.mxu0 %v991
      %1009 = vmatmul.f32.gmra.mxu0 %v798
      %v1010 = vpop.f32.mrf.mxu0
      %v1011 = vadd.f32 0.0, %v1010
      %1012 = vmatmul.f32.gmra.mxu0 %v801
      %v1013 = vpop.f32.mrf.mxu0
      %v1014 = vadd.f32 0.0, %v1013
      %1015 = vmatmul.f32.gmra.mxu0 %v804
      %v1016 = vpop.f32.mrf.mxu0
      %v1017 = vadd.f32 0.0, %v1016
      %1018 = vmatmul.f32.gmra.mxu0 %v807
      %v1019 = vpop.f32.mrf.mxu0
      %v1020 = vadd.f32 0.0, %v1019
      %1021 = vmatmul.f32.gmra.mxu0 %v810
      %v1022 = vpop.f32.mrf.mxu0
      %v1023 = vadd.f32 0.0, %v1022
      %1024 = vmatmul.f32.gmra.mxu0 %v813
      %v1025 = vpop.f32.mrf.mxu0
      %v1026 = vadd.f32 0.0, %v1025
      %1027 = vmatmul.f32.gmra.mxu0 %v816
      %v1028 = vpop.f32.mrf.mxu0
      %v1029 = vadd.f32 0.0, %v1028
      %1030 = vmatmul.f32.gmra.mxu0 %v819
      %v1031 = vpop.f32.mrf.mxu0
      %v1032 = vadd.f32 0.0, %v1031
      %1033 = vmatmul.f32.gmra.mxu0 %v822
      %v1034 = vpop.f32.mrf.mxu0
      %v1035 = vadd.f32 0.0, %v1034
      %1036 = vmatmul.f32.gmra.mxu0 %v825
      %v1037 = vpop.f32.mrf.mxu0
      %v1038 = vadd.f32 0.0, %v1037
      %1039 = vmatmul.f32.gmra.mxu0 %v828
      %v1040 = vpop.f32.mrf.mxu0
      %v1041 = vadd.f32 0.0, %v1040
      %1042 = vmatmul.f32.gmra.mxu0 %v831
      %v1043 = vpop.f32.mrf.mxu0
      %v1044 = vadd.f32 0.0, %v1043
      %1045 = vmatmul.f32.gmra.mxu0 %v834
      %v1046 = vpop.f32.mrf.mxu0
      %v1047 = vadd.f32 0.0, %v1046
      %1048 = vmatmul.f32.gmra.mxu0 %v837
      %v1049 = vpop.f32.mrf.mxu0
      %v1050 = vadd.f32 0.0, %v1049
      %1051 = vmatmul.f32.gmra.mxu0 %v840
      %v1052 = vpop.f32.mrf.mxu0
      %v1053 = vadd.f32 0.0, %v1052
      %1054 = vmatmul.f32.gmra.mxu0 %v843
      %v1055 = vpop.f32.mrf.mxu0
      %v1056 = vadd.f32 0.0, %v1055
      %1057 = vmatmul.f32.gmra.mxu0 %v846
      %v1058 = vpop.f32.mrf.mxu0
      %v1059 = vadd.f32 0.0, %v1058
      %1060 = vmatmul.f32.gmra.mxu0 %v849
      %v1061 = vpop.f32.mrf.mxu0
      %v1062 = vadd.f32 0.0, %v1061
      %1063 = vmatmul.f32.gmra.mxu0 %v852
      %v1064 = vpop.f32.mrf.mxu0
      %v1065 = vadd.f32 0.0, %v1064
      %1066 = vmatmul.f32.gmra.mxu0 %v855
      %v1067 = vpop.f32.mrf.mxu0
      %v1068 = vadd.f32 0.0, %v1067
      %1069 = vmatmul.f32.gmra.mxu0 %v858
      %v1070 = vpop.f32.mrf.mxu0
      %v1071 = vadd.f32 0.0, %v1070
      %1072 = vmatmul.f32.gmra.mxu0 %v861
      %v1073 = vpop.f32.mrf.mxu0
      %v1074 = vadd.f32 0.0, %v1073
      %1075 = vmatmul.f32.gmra.mxu0 %v864
      %v1076 = vpop.f32.mrf.mxu0
      %v1077 = vadd.f32 0.0, %v1076
      %1078 = vmatmul.f32.gmra.mxu0 %v867
      %v1079 = vpop.f32.mrf.mxu0
      %v1080 = vadd.f32 0.0, %v1079
      %1081 = vmatmul.f32.gmra.mxu0 %v870
      %v1082 = vpop.f32.mrf.mxu0
      %v1083 = vadd.f32 0.0, %v1082
      %1084 = vmatmul.f32.gmra.mxu0 %v873
      %v1085 = vpop.f32.mrf.mxu0
      %v1086 = vadd.f32 0.0, %v1085
      %1087 = vmatmul.f32.gmra.mxu0 %v876
      %v1088 = vpop.f32.mrf.mxu0
      %v1089 = vadd.f32 0.0, %v1088
      %1090 = vmatmul.f32.gmra.mxu0 %v879
      %v1091 = vpop.f32.mrf.mxu0
      %v1092 = vadd.f32 0.0, %v1091
      %1093 = vmatmul.f32.gmra.mxu0 %v882
      %v1094 = vpop.f32.mrf.mxu0
      %v1095 = vadd.f32 0.0, %v1094
      %1096 = vmatmul.f32.gmra.mxu0 %v885
      %v1097 = vpop.f32.mrf.mxu0
      %v1098 = vadd.f32 0.0, %v1097
      %1099 = vmatmul.f32.gmra.mxu0 %v888
      %v1100 = vpop.f32.mrf.mxu0
      %v1101 = vadd.f32 0.0, %v1100
      %1102 = vmatmul.f32.gmra.mxu0 %v891
      %v1103 = vpop.f32.mrf.mxu0
      %v1104 = vadd.f32 0.0, %v1103
      %1105 = vmatmul.f32.gmra.mxu0 %v894
      %v1106 = vpop.f32.mrf.mxu0
      %v1107 = vadd.f32 0.0, %v1106
      %1108 = vmatmul.f32.gmra.mxu0 %v897
      %v1109 = vpop.f32.mrf.mxu0
      %v1110 = vadd.f32 0.0, %v1109
      %1111 = vmatmul.f32.gmra.mxu0 %v900
      %v1112 = vpop.f32.mrf.mxu0
      %v1113 = vadd.f32 0.0, %v1112
      %1114 = vmatmul.f32.gmra.mxu0 %v903
      %v1115 = vpop.f32.mrf.mxu0
      %v1116 = vadd.f32 0.0, %v1115
      %1117 = vmatmul.f32.gmra.mxu0 %v906
      %v1118 = vpop.f32.mrf.mxu0
      %v1119 = vadd.f32 0.0, %v1118
      %1120 = vmatmul.f32.gmra.mxu0 %v909
      %v1121 = vpop.f32.mrf.mxu0
      %v1122 = vadd.f32 0.0, %v1121
      %1123 = vmatmul.f32.gmra.mxu0 %v912
      %v1124 = vpop.f32.mrf.mxu0
      %v1125 = vadd.f32 0.0, %v1124
      %1126 = vmatmul.f32.gmra.mxu0 %v915
      %v1127 = vpop.f32.mrf.mxu0
      %v1128 = vadd.f32 0.0, %v1127
      %1129 = vmatmul.f32.gmra.mxu0 %v918
      %v1130 = vpop.f32.mrf.mxu0
      %v1131 = vadd.f32 0.0, %v1130
      %1132 = vmatmul.f32.gmra.mxu0 %v921
      %v1133 = vpop.f32.mrf.mxu0
      %v1134 = vadd.f32 0.0, %v1133
      %1135 = vmatmul.f32.gmra.mxu0 %v924
      %v1136 = vpop.f32.mrf.mxu0
      %v1137 = vadd.f32 0.0, %v1136
      %1138 = vmatmul.f32.gmra.mxu0 %v927
      %v1139 = vpop.f32.mrf.mxu0
      %v1140 = vadd.f32 0.0, %v1139
      %1141 = vmatmul.f32.gmra.mxu0 %v930
      %v1142 = vpop.f32.mrf.mxu0
      %v1143 = vadd.f32 0.0, %v1142
      %1144 = vmatmul.f32.gmra.mxu0 %v933
      %v1145 = vpop.f32.mrf.mxu0
      %v1146 = vadd.f32 0.0, %v1145
      %1147 = vmatmul.f32.gmra.mxu0 %v936
      %v1148 = vpop.f32.mrf.mxu0
      %v1149 = vadd.f32 0.0, %v1148
      %1150 = vmatmul.f32.gmra.mxu0 %v939
      %v1151 = vpop.f32.mrf.mxu0
      %v1152 = vadd.f32 0.0, %v1151
      %1153 = vmatmul.f32.gmra.mxu0 %v942
      %v1154 = vpop.f32.mrf.mxu0
      %v1155 = vadd.f32 0.0, %v1154
      %1156 = vmatmul.f32.gmra.mxu0 %v945
      %v1157 = vpop.f32.mrf.mxu0
      %v1158 = vadd.f32 0.0, %v1157
      %1159 = vmatmul.f32.gmra.mxu0 %v948
      %v1160 = vpop.f32.mrf.mxu0
      %v1161 = vadd.f32 0.0, %v1160
      %1162 = vmatmul.f32.gmra.mxu0 %v951
      %v1163 = vpop.f32.mrf.mxu0
      %v1164 = vadd.f32 0.0, %v1163
      %1165 = vmatmul.f32.gmra.mxu0 %v954
      %v1166 = vpop.f32.mrf.mxu0
      %v1167 = vadd.f32 0.0, %v1166
      %1168 = vmatmul.f32.gmra.mxu0 %v957
      %v1169 = vpop.f32.mrf.mxu0
      %v1170 = vadd.f32 0.0, %v1169
      %1171 = vmatmul.f32.gmra.mxu0 %v960
      %v1172 = vpop.f32.mrf.mxu0
      %v1173 = vadd.f32 0.0, %v1172
      %1174 = vmatmul.f32.gmra.mxu0 %v963
      %v1175 = vpop.f32.mrf.mxu0
      %v1176 = vadd.f32 0.0, %v1175
      %1177 = vmatmul.f32.gmra.mxu0 %v966
      %v1178 = vpop.f32.mrf.mxu0
      %v1179 = vadd.f32 0.0, %v1178
      %1180 = vmatmul.f32.gmra.mxu0 %v969
      %v1181 = vpop.f32.mrf.mxu0
      %v1182 = vadd.f32 0.0, %v1181
      %1183 = vmatmul.f32.gmra.mxu0 %v972
      %v1184 = vpop.f32.mrf.mxu0
      %v1185 = vadd.f32 0.0, %v1184
      %1186 = vmatmul.f32.gmra.mxu0 %v975
      %v1187 = vpop.f32.mrf.mxu0
      %v1188 = vadd.f32 0.0, %v1187
      %1189 = vmatmul.f32.gmra.mxu0 %v978
      %v1190 = vpop.f32.mrf.mxu0
      %v1191 = vadd.f32 0.0, %v1190
      %1192 = vmatmul.f32.gmra.mxu0 %v981
      %v1193 = vpop.f32.mrf.mxu0
      %v1194 = vadd.f32 0.0, %v1193
      %1195 = vmatmul.f32.gmra.mxu0 %v984
      %v1196 = vpop.f32.mrf.mxu0
      %v1197 = vadd.f32 0.0, %v1196
      %1198 = vmatmul.f32.gmra.mxu0 %v987
      %v1199 = vpop.f32.mrf.mxu0
      %v1200 = vadd.f32 0.0, %v1199
      %1201 = vdwg.mxu0
      %v1202 = vadd.f32 %v732, %v1011
      %v1203 = vadd.f32 %v733, %v1014
      %v1204 = vadd.f32 %v734, %v1017
      %v1205 = vadd.f32 %v735, %v1020
      %v1206 = vadd.f32 %v736, %v1023
      %v1207 = vadd.f32 %v737, %v1026
      %v1208 = vadd.f32 %v738, %v1029
      %v1209 = vadd.f32 %v739, %v1032
      %v1210 = vadd.f32 %v740, %v1035
      %v1211 = vadd.f32 %v741, %v1038
      %v1212 = vadd.f32 %v742, %v1041
      %v1213 = vadd.f32 %v743, %v1044
      %v1214 = vadd.f32 %v744, %v1047
      %v1215 = vadd.f32 %v745, %v1050
      %v1216 = vadd.f32 %v746, %v1053
      %v1217 = vadd.f32 %v747, %v1056
      %v1218 = vadd.f32 %v748, %v1059
      %v1219 = vadd.f32 %v749, %v1062
      %v1220 = vadd.f32 %v750, %v1065
      %v1221 = vadd.f32 %v751, %v1068
      %v1222 = vadd.f32 %v752, %v1071
      %v1223 = vadd.f32 %v753, %v1074
      %v1224 = vadd.f32 %v754, %v1077
      %v1225 = vadd.f32 %v755, %v1080
      %v1226 = vadd.f32 %v756, %v1083
      %v1227 = vadd.f32 %v757, %v1086
      %v1228 = vadd.f32 %v758, %v1089
      %v1229 = vadd.f32 %v759, %v1092
      %v1230 = vadd.f32 %v760, %v1095
      %v1231 = vadd.f32 %v761, %v1098
      %v1232 = vadd.f32 %v762, %v1101
      %v1233 = vadd.f32 %v763, %v1104
      %v1234 = vadd.f32 %v764, %v1107
      %v1235 = vadd.f32 %v765, %v1110
      %v1236 = vadd.f32 %v766, %v1113
      %v1237 = vadd.f32 %v767, %v1116
      %v1238 = vadd.f32 %v768, %v1119
      %v1239 = vadd.f32 %v769, %v1122
      %v1240 = vadd.f32 %v770, %v1125
      %v1241 = vadd.f32 %v771, %v1128
      %v1242 = vadd.f32 %v772, %v1131
      %v1243 = vadd.f32 %v773, %v1134
      %v1244 = vadd.f32 %v774, %v1137
      %v1245 = vadd.f32 %v775, %v1140
      %v1246 = vadd.f32 %v776, %v1143
      %v1247 = vadd.f32 %v777, %v1146
      %v1248 = vadd.f32 %v778, %v1149
      %v1249 = vadd.f32 %v779, %v1152
      %v1250 = vadd.f32 %v780, %v1155
      %v1251 = vadd.f32 %v781, %v1158
      %v1252 = vadd.f32 %v782, %v1161
      %v1253 = vadd.f32 %v783, %v1164
      %v1254 = vadd.f32 %v784, %v1167
      %v1255 = vadd.f32 %v785, %v1170
      %v1256 = vadd.f32 %v786, %v1173
      %v1257 = vadd.f32 %v787, %v1176
      %v1258 = vadd.f32 %v788, %v1179
      %v1259 = vadd.f32 %v789, %v1182
      %v1260 = vadd.f32 %v790, %v1185
      %v1261 = vadd.f32 %v791, %v1188
      %v1262 = vadd.f32 %v792, %v1191
      %v1263 = vadd.f32 %v793, %v1194
      %v1264 = vadd.f32 %v794, %v1197
      %v1265 = vadd.f32 %v795, %v1200
      %v1267 = vperm.slane %v408, 0
      %v1269 = vadd.f32 %v1202, %v1267
      %v1270 = vadd.f32 %v1203, %v1267
      %v1271 = vadd.f32 %v1204, %v1267
      %v1272 = vadd.f32 %v1205, %v1267
      %v1273 = vadd.f32 %v1206, %v1267
      %v1274 = vadd.f32 %v1207, %v1267
      %v1275 = vadd.f32 %v1208, %v1267
      %v1276 = vadd.f32 %v1209, %v1267
      %v1277 = vadd.f32 %v1210, %v1267
      %v1278 = vadd.f32 %v1211, %v1267
      %v1279 = vadd.f32 %v1212, %v1267
      %v1280 = vadd.f32 %v1213, %v1267
      %v1281 = vadd.f32 %v1214, %v1267
      %v1282 = vadd.f32 %v1215, %v1267
      %v1283 = vadd.f32 %v1216, %v1267
      %v1284 = vadd.f32 %v1217, %v1267
      %v1285 = vadd.f32 %v1218, %v1267
      %v1286 = vadd.f32 %v1219, %v1267
      %v1287 = vadd.f32 %v1220, %v1267
      %v1288 = vadd.f32 %v1221, %v1267
      %v1289 = vadd.f32 %v1222, %v1267
      %v1290 = vadd.f32 %v1223, %v1267
      %v1291 = vadd.f32 %v1224, %v1267
      %v1292 = vadd.f32 %v1225, %v1267
      %v1293 = vadd.f32 %v1226, %v1267
      %v1294 = vadd.f32 %v1227, %v1267
      %v1295 = vadd.f32 %v1228, %v1267
      %v1296 = vadd.f32 %v1229, %v1267
      %v1297 = vadd.f32 %v1230, %v1267
      %v1298 = vadd.f32 %v1231, %v1267
      %v1299 = vadd.f32 %v1232, %v1267
      %v1300 = vadd.f32 %v1233, %v1267
      %v1301 = vadd.f32 %v1234, %v1267
      %v1302 = vadd.f32 %v1235, %v1267
      %v1303 = vadd.f32 %v1236, %v1267
      %v1304 = vadd.f32 %v1237, %v1267
      %v1305 = vadd.f32 %v1238, %v1267
      %v1306 = vadd.f32 %v1239, %v1267
      %v1307 = vadd.f32 %v1240, %v1267
      %v1308 = vadd.f32 %v1241, %v1267
      %v1309 = vadd.f32 %v1242, %v1267
      %v1310 = vadd.f32 %v1243, %v1267
      %v1311 = vadd.f32 %v1244, %v1267
      %v1312 = vadd.f32 %v1245, %v1267
      %v1313 = vadd.f32 %v1246, %v1267
      %v1314 = vadd.f32 %v1247, %v1267
      %v1315 = vadd.f32 %v1248, %v1267
      %v1316 = vadd.f32 %v1249, %v1267
      %v1317 = vadd.f32 %v1250, %v1267
      %v1318 = vadd.f32 %v1251, %v1267
      %v1319 = vadd.f32 %v1252, %v1267
      %v1320 = vadd.f32 %v1253, %v1267
      %v1321 = vadd.f32 %v1254, %v1267
      %v1322 = vadd.f32 %v1255, %v1267
      %v1323 = vadd.f32 %v1256, %v1267
      %v1324 = vadd.f32 %v1257, %v1267
      %v1325 = vadd.f32 %v1258, %v1267
      %v1326 = vadd.f32 %v1259, %v1267
      %v1327 = vadd.f32 %v1260, %v1267
      %v1328 = vadd.f32 %v1261, %v1267
      %v1329 = vadd.f32 %v1262, %v1267
      %v1330 = vadd.f32 %v1263, %v1267
      %v1331 = vadd.f32 %v1264, %v1267
      %v1332 = vadd.f32 %v1265, %v1267
      %v1333 = vmax.f32 %v1269, 0.0
      %v1334 = vmax.f32 %v1270, 0.0
      %v1335 = vmax.f32 %v1271, 0.0
      %v1336 = vmax.f32 %v1272, 0.0
      %v1337 = vmax.f32 %v1273, 0.0
      %v1338 = vmax.f32 %v1274, 0.0
      %v1339 = vmax.f32 %v1275, 0.0
      %v1340 = vmax.f32 %v1276, 0.0
      %v1341 = vmax.f32 %v1277, 0.0
      %v1342 = vmax.f32 %v1278, 0.0
      %v1343 = vmax.f32 %v1279, 0.0
      %v1344 = vmax.f32 %v1280, 0.0
      %v1345 = vmax.f32 %v1281, 0.0
      %v1346 = vmax.f32 %v1282, 0.0
      %v1347 = vmax.f32 %v1283, 0.0
      %v1348 = vmax.f32 %v1284, 0.0
      %v1349 = vmax.f32 %v1285, 0.0
      %v1350 = vmax.f32 %v1286, 0.0
      %v1351 = vmax.f32 %v1287, 0.0
      %v1352 = vmax.f32 %v1288, 0.0
      %v1353 = vmax.f32 %v1289, 0.0
      %v1354 = vmax.f32 %v1290, 0.0
      %v1355 = vmax.f32 %v1291, 0.0
      %v1356 = vmax.f32 %v1292, 0.0
      %v1357 = vmax.f32 %v1293, 0.0
      %v1358 = vmax.f32 %v1294, 0.0
      %v1359 = vmax.f32 %v1295, 0.0
      %v1360 = vmax.f32 %v1296, 0.0
      %v1361 = vmax.f32 %v1297, 0.0
      %v1362 = vmax.f32 %v1298, 0.0
      %v1363 = vmax.f32 %v1299, 0.0
      %v1364 = vmax.f32 %v1300, 0.0
      %v1365 = vmax.f32 %v1301, 0.0
      %v1366 = vmax.f32 %v1302, 0.0
      %v1367 = vmax.f32 %v1303, 0.0
      %v1368 = vmax.f32 %v1304, 0.0
      %v1369 = vmax.f32 %v1305, 0.0
      %v1370 = vmax.f32 %v1306, 0.0
      %v1371 = vmax.f32 %v1307, 0.0
      %v1372 = vmax.f32 %v1308, 0.0
      %v1373 = vmax.f32 %v1309, 0.0
      %v1374 = vmax.f32 %v1310, 0.0
      %v1375 = vmax.f32 %v1311, 0.0
      %v1376 = vmax.f32 %v1312, 0.0
      %v1377 = vmax.f32 %v1313, 0.0
      %v1378 = vmax.f32 %v1314, 0.0
      %v1379 = vmax.f32 %v1315, 0.0
      %v1380 = vmax.f32 %v1316, 0.0
      %v1381 = vmax.f32 %v1317, 0.0
      %v1382 = vmax.f32 %v1318, 0.0
      %v1383 = vmax.f32 %v1319, 0.0
      %v1384 = vmax.f32 %v1320, 0.0
      %v1385 = vmax.f32 %v1321, 0.0
      %v1386 = vmax.f32 %v1322, 0.0
      %v1387 = vmax.f32 %v1323, 0.0
      %v1388 = vmax.f32 %v1324, 0.0
      %v1389 = vmax.f32 %v1325, 0.0
      %v1390 = vmax.f32 %v1326, 0.0
      %v1391 = vmax.f32 %v1327, 0.0
      %v1392 = vmax.f32 %v1328, 0.0
      %v1393 = vmax.f32 %v1329, 0.0
      %v1394 = vmax.f32 %v1330, 0.0
      %v1395 = vmax.f32 %v1331, 0.0
      %v1396 = vmax.f32 %v1332, 0.0
      %v1398 = vperm.slane %v409, 0
      %v1400 = vmul.f32 %v1333, %v1398
      %v1401 = vmul.f32 %v1334, %v1398
      %v1402 = vmul.f32 %v1335, %v1398
      %v1403 = vmul.f32 %v1336, %v1398
      %v1404 = vmul.f32 %v1337, %v1398
      %v1405 = vmul.f32 %v1338, %v1398
      %v1406 = vmul.f32 %v1339, %v1398
      %v1407 = vmul.f32 %v1340, %v1398
      %v1408 = vmul.f32 %v1341, %v1398
      %v1409 = vmul.f32 %v1342, %v1398
      %v1410 = vmul.f32 %v1343, %v1398
      %v1411 = vmul.f32 %v1344, %v1398
      %v1412 = vmul.f32 %v1345, %v1398
      %v1413 = vmul.f32 %v1346, %v1398
      %v1414 = vmul.f32 %v1347, %v1398
      %v1415 = vmul.f32 %v1348, %v1398
      %v1416 = vmul.f32 %v1349, %v1398
      %v1417 = vmul.f32 %v1350, %v1398
      %v1418 = vmul.f32 %v1351, %v1398
      %v1419 = vmul.f32 %v1352, %v1398
      %v1420 = vmul.f32 %v1353, %v1398
      %v1421 = vmul.f32 %v1354, %v1398
      %v1422 = vmul.f32 %v1355, %v1398
      %v1423 = vmul.f32 %v1356, %v1398
      %v1424 = vmul.f32 %v1357, %v1398
      %v1425 = vmul.f32 %v1358, %v1398
      %v1426 = vmul.f32 %v1359, %v1398
      %v1427 = vmul.f32 %v1360, %v1398
      %v1428 = vmul.f32 %v1361, %v1398
      %v1429 = vmul.f32 %v1362, %v1398
      %v1430 = vmul.f32 %v1363, %v1398
      %v1431 = vmul.f32 %v1364, %v1398
      %v1432 = vmul.f32 %v1365, %v1398
      %v1433 = vmul.f32 %v1366, %v1398
      %v1434 = vmul.f32 %v1367, %v1398
      %v1435 = vmul.f32 %v1368, %v1398
      %v1436 = vmul.f32 %v1369, %v1398
      %v1437 = vmul.f32 %v1370, %v1398
      %v1438 = vmul.f32 %v1371, %v1398
      %v1439 = vmul.f32 %v1372, %v1398
      %v1440 = vmul.f32 %v1373, %v1398
      %v1441 = vmul.f32 %v1374, %v1398
      %v1442 = vmul.f32 %v1375, %v1398
      %v1443 = vmul.f32 %v1376, %v1398
      %v1444 = vmul.f32 %v1377, %v1398
      %v1445 = vmul.f32 %v1378, %v1398
      %v1446 = vmul.f32 %v1379, %v1398
      %v1447 = vmul.f32 %v1380, %v1398
      %v1448 = vmul.f32 %v1381, %v1398
      %v1449 = vmul.f32 %v1382, %v1398
      %v1450 = vmul.f32 %v1383, %v1398
      %v1451 = vmul.f32 %v1384, %v1398
      %v1452 = vmul.f32 %v1385, %v1398
      %v1453 = vmul.f32 %v1386, %v1398
      %v1454 = vmul.f32 %v1387, %v1398
      %v1455 = vmul.f32 %v1388, %v1398
      %v1456 = vmul.f32 %v1389, %v1398
      %v1457 = vmul.f32 %v1390, %v1398
      %v1458 = vmul.f32 %v1391, %v1398
      %v1459 = vmul.f32 %v1392, %v1398
      %v1460 = vmul.f32 %v1393, %v1398
      %v1461 = vmul.f32 %v1394, %v1398
      %v1462 = vmul.f32 %v1395, %v1398
      %v1463 = vmul.f32 %v1396, %v1398
      %vm1464 = vcmask 261120
      %v1465 = vsel %vm1464, %v1400, 0.0
      %1466 = vadd.xlane.f32.xlu0 %v1465
      %v1467 = vpop.xlane.xlu0 %1466
      %v1468 = vsel %vm1464, %v1401, 0.0
      %1469 = vadd.xlane.f32.xlu0 %v1468
      %v1470 = vpop.xlane.xlu0 %1469
      %v1471 = vsel %vm1464, %v1402, 0.0
      %1472 = vadd.xlane.f32.xlu0 %v1471
      %v1473 = vpop.xlane.xlu0 %1472
      %v1474 = vsel %vm1464, %v1403, 0.0
      %1475 = vadd.xlane.f32.xlu0 %v1474
      %v1476 = vpop.xlane.xlu0 %1475
      %v1477 = vsel %vm1464, %v1404, 0.0
      %1478 = vadd.xlane.f32.xlu0 %v1477
      %v1479 = vpop.xlane.xlu0 %1478
      %v1480 = vsel %vm1464, %v1405, 0.0
      %1481 = vadd.xlane.f32.xlu0 %v1480
      %v1482 = vpop.xlane.xlu0 %1481
      %v1483 = vsel %vm1464, %v1406, 0.0
      %1484 = vadd.xlane.f32.xlu0 %v1483
      %v1485 = vpop.xlane.xlu0 %1484
      %v1486 = vsel %vm1464, %v1407, 0.0
      %1487 = vadd.xlane.f32.xlu0 %v1486
      %v1488 = vpop.xlane.xlu0 %1487
      %v1489 = vsel %vm1464, %v1408, 0.0
      %1490 = vadd.xlane.f32.xlu0 %v1489
      %v1491 = vpop.xlane.xlu0 %1490
      %v1492 = vsel %vm1464, %v1409, 0.0
      %1493 = vadd.xlane.f32.xlu0 %v1492
      %v1494 = vpop.xlane.xlu0 %1493
      %v1495 = vsel %vm1464, %v1410, 0.0
      %1496 = vadd.xlane.f32.xlu0 %v1495
      %v1497 = vpop.xlane.xlu0 %1496
      %v1498 = vsel %vm1464, %v1411, 0.0
      %1499 = vadd.xlane.f32.xlu0 %v1498
      %v1500 = vpop.xlane.xlu0 %1499
      %v1501 = vsel %vm1464, %v1412, 0.0
      %1502 = vadd.xlane.f32.xlu0 %v1501
      %v1503 = vpop.xlane.xlu0 %1502
      %v1504 = vsel %vm1464, %v1413, 0.0
      %1505 = vadd.xlane.f32.xlu0 %v1504
      %v1506 = vpop.xlane.xlu0 %1505
      %v1507 = vsel %vm1464, %v1414, 0.0
      %1508 = vadd.xlane.f32.xlu0 %v1507
      %v1509 = vpop.xlane.xlu0 %1508
      %v1510 = vsel %vm1464, %v1415, 0.0
      %1511 = vadd.xlane.f32.xlu0 %v1510
      %v1512 = vpop.xlane.xlu0 %1511
      %v1513 = vsel %vm1464, %v1416, 0.0
      %1514 = vadd.xlane.f32.xlu0 %v1513
      %v1515 = vpop.xlane.xlu0 %1514
      %v1516 = vsel %vm1464, %v1417, 0.0
      %1517 = vadd.xlane.f32.xlu0 %v1516
      %v1518 = vpop.xlane.xlu0 %1517
      %v1519 = vsel %vm1464, %v1418, 0.0
      %1520 = vadd.xlane.f32.xlu0 %v1519
      %v1521 = vpop.xlane.xlu0 %1520
      %v1522 = vsel %vm1464, %v1419, 0.0
      %1523 = vadd.xlane.f32.xlu0 %v1522
      %v1524 = vpop.xlane.xlu0 %1523
      %v1525 = vsel %vm1464, %v1420, 0.0
      %1526 = vadd.xlane.f32.xlu0 %v1525
      %v1527 = vpop.xlane.xlu0 %1526
      %v1528 = vsel %vm1464, %v1421, 0.0
      %1529 = vadd.xlane.f32.xlu0 %v1528
      %v1530 = vpop.xlane.xlu0 %1529
      %v1531 = vsel %vm1464, %v1422, 0.0
      %1532 = vadd.xlane.f32.xlu0 %v1531
      %v1533 = vpop.xlane.xlu0 %1532
      %v1534 = vsel %vm1464, %v1423, 0.0
      %1535 = vadd.xlane.f32.xlu0 %v1534
      %v1536 = vpop.xlane.xlu0 %1535
      %v1537 = vsel %vm1464, %v1424, 0.0
      %1538 = vadd.xlane.f32.xlu0 %v1537
      %v1539 = vpop.xlane.xlu0 %1538
      %v1540 = vsel %vm1464, %v1425, 0.0
      %1541 = vadd.xlane.f32.xlu0 %v1540
      %v1542 = vpop.xlane.xlu0 %1541
      %v1543 = vsel %vm1464, %v1426, 0.0
      %1544 = vadd.xlane.f32.xlu0 %v1543
      %v1545 = vpop.xlane.xlu0 %1544
      %v1546 = vsel %vm1464, %v1427, 0.0
      %1547 = vadd.xlane.f32.xlu0 %v1546
      %v1548 = vpop.xlane.xlu0 %1547
      %v1549 = vsel %vm1464, %v1428, 0.0
      %1550 = vadd.xlane.f32.xlu0 %v1549
      %v1551 = vpop.xlane.xlu0 %1550
      %v1552 = vsel %vm1464, %v1429, 0.0
      %1553 = vadd.xlane.f32.xlu0 %v1552
      %v1554 = vpop.xlane.xlu0 %1553
      %v1555 = vsel %vm1464, %v1430, 0.0
      %1556 = vadd.xlane.f32.xlu0 %v1555
      %v1557 = vpop.xlane.xlu0 %1556
      %v1558 = vsel %vm1464, %v1431, 0.0
      %1559 = vadd.xlane.f32.xlu0 %v1558
      %v1560 = vpop.xlane.xlu0 %1559
      %v1561 = vsel %vm1464, %v1432, 0.0
      %1562 = vadd.xlane.f32.xlu0 %v1561
      %v1563 = vpop.xlane.xlu0 %1562
      %v1564 = vsel %vm1464, %v1433, 0.0
      %1565 = vadd.xlane.f32.xlu0 %v1564
      %v1566 = vpop.xlane.xlu0 %1565
      %v1567 = vsel %vm1464, %v1434, 0.0
      %1568 = vadd.xlane.f32.xlu0 %v1567
      %v1569 = vpop.xlane.xlu0 %1568
      %v1570 = vsel %vm1464, %v1435, 0.0
      %1571 = vadd.xlane.f32.xlu0 %v1570
      %v1572 = vpop.xlane.xlu0 %1571
      %v1573 = vsel %vm1464, %v1436, 0.0
      %1574 = vadd.xlane.f32.xlu0 %v1573
      %v1575 = vpop.xlane.xlu0 %1574
      %v1576 = vsel %vm1464, %v1437, 0.0
      %1577 = vadd.xlane.f32.xlu0 %v1576
      %v1578 = vpop.xlane.xlu0 %1577
      %v1579 = vsel %vm1464, %v1438, 0.0
      %1580 = vadd.xlane.f32.xlu0 %v1579
      %v1581 = vpop.xlane.xlu0 %1580
      %v1582 = vsel %vm1464, %v1439, 0.0
      %1583 = vadd.xlane.f32.xlu0 %v1582
      %v1584 = vpop.xlane.xlu0 %1583
      %v1585 = vsel %vm1464, %v1440, 0.0
      %1586 = vadd.xlane.f32.xlu0 %v1585
      %v1587 = vpop.xlane.xlu0 %1586
      %v1588 = vsel %vm1464, %v1441, 0.0
      %1589 = vadd.xlane.f32.xlu0 %v1588
      %v1590 = vpop.xlane.xlu0 %1589
      %v1591 = vsel %vm1464, %v1442, 0.0
      %1592 = vadd.xlane.f32.xlu0 %v1591
      %v1593 = vpop.xlane.xlu0 %1592
      %v1594 = vsel %vm1464, %v1443, 0.0
      %1595 = vadd.xlane.f32.xlu0 %v1594
      %v1596 = vpop.xlane.xlu0 %1595
      %v1597 = vsel %vm1464, %v1444, 0.0
      %1598 = vadd.xlane.f32.xlu0 %v1597
      %v1599 = vpop.xlane.xlu0 %1598
      %v1600 = vsel %vm1464, %v1445, 0.0
      %1601 = vadd.xlane.f32.xlu0 %v1600
      %v1602 = vpop.xlane.xlu0 %1601
      %v1603 = vsel %vm1464, %v1446, 0.0
      %1604 = vadd.xlane.f32.xlu0 %v1603
      %v1605 = vpop.xlane.xlu0 %1604
      %v1606 = vsel %vm1464, %v1447, 0.0
      %1607 = vadd.xlane.f32.xlu0 %v1606
      %v1608 = vpop.xlane.xlu0 %1607
      %v1609 = vsel %vm1464, %v1448, 0.0
      %1610 = vadd.xlane.f32.xlu0 %v1609
      %v1611 = vpop.xlane.xlu0 %1610
      %v1612 = vsel %vm1464, %v1449, 0.0
      %1613 = vadd.xlane.f32.xlu0 %v1612
      %v1614 = vpop.xlane.xlu0 %1613
      %v1615 = vsel %vm1464, %v1450, 0.0
      %1616 = vadd.xlane.f32.xlu0 %v1615
      %v1617 = vpop.xlane.xlu0 %1616
      %v1618 = vsel %vm1464, %v1451, 0.0
      %1619 = vadd.xlane.f32.xlu0 %v1618
      %v1620 = vpop.xlane.xlu0 %1619
      %v1621 = vsel %vm1464, %v1452, 0.0
      %1622 = vadd.xlane.f32.xlu0 %v1621
      %v1623 = vpop.xlane.xlu0 %1622
      %v1624 = vsel %vm1464, %v1453, 0.0
      %1625 = vadd.xlane.f32.xlu0 %v1624
      %v1626 = vpop.xlane.xlu0 %1625
      %v1627 = vsel %vm1464, %v1454, 0.0
      %1628 = vadd.xlane.f32.xlu0 %v1627
      %v1629 = vpop.xlane.xlu0 %1628
      %v1630 = vsel %vm1464, %v1455, 0.0
      %1631 = vadd.xlane.f32.xlu0 %v1630
      %v1632 = vpop.xlane.xlu0 %1631
      %v1633 = vsel %vm1464, %v1456, 0.0
      %1634 = vadd.xlane.f32.xlu0 %v1633
      %v1635 = vpop.xlane.xlu0 %1634
      %v1636 = vsel %vm1464, %v1457, 0.0
      %1637 = vadd.xlane.f32.xlu0 %v1636
      %v1638 = vpop.xlane.xlu0 %1637
      %v1639 = vsel %vm1464, %v1458, 0.0
      %1640 = vadd.xlane.f32.xlu0 %v1639
      %v1641 = vpop.xlane.xlu0 %1640
      %v1642 = vsel %vm1464, %v1459, 0.0
      %1643 = vadd.xlane.f32.xlu0 %v1642
      %v1644 = vpop.xlane.xlu0 %1643
      %v1645 = vsel %vm1464, %v1460, 0.0
      %1646 = vadd.xlane.f32.xlu0 %v1645
      %v1647 = vpop.xlane.xlu0 %1646
      %v1648 = vsel %vm1464, %v1461, 0.0
      %1649 = vadd.xlane.f32.xlu0 %v1648
      %v1650 = vpop.xlane.xlu0 %1649
      %v1651 = vsel %vm1464, %v1462, 0.0
      %1652 = vadd.xlane.f32.xlu0 %v1651
      %v1653 = vpop.xlane.xlu0 %1652
      %v1654 = vsel %vm1464, %v1463, 0.0
      %1655 = vadd.xlane.f32.xlu0 %v1654
      %v1656 = vpop.xlane.xlu0 %1655
      %v1657 = vstv %s410
      %v1658 = vadd.f32 %v1467, %v1657
      %v1659 = vadd.f32 %v1470, %v1657
      %v1660 = vadd.f32 %v1473, %v1657
      %v1661 = vadd.f32 %v1476, %v1657
      %v1662 = vadd.f32 %v1479, %v1657
      %v1663 = vadd.f32 %v1482, %v1657
      %v1664 = vadd.f32 %v1485, %v1657
      %v1665 = vadd.f32 %v1488, %v1657
      %v1666 = vadd.f32 %v1491, %v1657
      %v1667 = vadd.f32 %v1494, %v1657
      %v1668 = vadd.f32 %v1497, %v1657
      %v1669 = vadd.f32 %v1500, %v1657
      %v1670 = vadd.f32 %v1503, %v1657
      %v1671 = vadd.f32 %v1506, %v1657
      %v1672 = vadd.f32 %v1509, %v1657
      %v1673 = vadd.f32 %v1512, %v1657
      %v1674 = vadd.f32 %v1515, %v1657
      %v1675 = vadd.f32 %v1518, %v1657
      %v1676 = vadd.f32 %v1521, %v1657
      %v1677 = vadd.f32 %v1524, %v1657
      %v1678 = vadd.f32 %v1527, %v1657
      %v1679 = vadd.f32 %v1530, %v1657
      %v1680 = vadd.f32 %v1533, %v1657
      %v1681 = vadd.f32 %v1536, %v1657
      %v1682 = vadd.f32 %v1539, %v1657
      %v1683 = vadd.f32 %v1542, %v1657
      %v1684 = vadd.f32 %v1545, %v1657
      %v1685 = vadd.f32 %v1548, %v1657
      %v1686 = vadd.f32 %v1551, %v1657
      %v1687 = vadd.f32 %v1554, %v1657
      %v1688 = vadd.f32 %v1557, %v1657
      %v1689 = vadd.f32 %v1560, %v1657
      %v1690 = vadd.f32 %v1563, %v1657
      %v1691 = vadd.f32 %v1566, %v1657
      %v1692 = vadd.f32 %v1569, %v1657
      %v1693 = vadd.f32 %v1572, %v1657
      %v1694 = vadd.f32 %v1575, %v1657
      %v1695 = vadd.f32 %v1578, %v1657
      %v1696 = vadd.f32 %v1581, %v1657
      %v1697 = vadd.f32 %v1584, %v1657
      %v1698 = vadd.f32 %v1587, %v1657
      %v1699 = vadd.f32 %v1590, %v1657
      %v1700 = vadd.f32 %v1593, %v1657
      %v1701 = vadd.f32 %v1596, %v1657
      %v1702 = vadd.f32 %v1599, %v1657
      %v1703 = vadd.f32 %v1602, %v1657
      %v1704 = vadd.f32 %v1605, %v1657
      %v1705 = vadd.f32 %v1608, %v1657
      %v1706 = vadd.f32 %v1611, %v1657
      %v1707 = vadd.f32 %v1614, %v1657
      %v1708 = vadd.f32 %v1617, %v1657
      %v1709 = vadd.f32 %v1620, %v1657
      %v1710 = vadd.f32 %v1623, %v1657
      %v1711 = vadd.f32 %v1626, %v1657
      %v1712 = vadd.f32 %v1629, %v1657
      %v1713 = vadd.f32 %v1632, %v1657
      %v1714 = vadd.f32 %v1635, %v1657
      %v1715 = vadd.f32 %v1638, %v1657
      %v1716 = vadd.f32 %v1641, %v1657
      %v1717 = vadd.f32 %v1644, %v1657
      %v1718 = vadd.f32 %v1647, %v1657
      %v1719 = vadd.f32 %v1650, %v1657
      %v1720 = vadd.f32 %v1653, %v1657
      %v1721 = vadd.f32 %v1656, %v1657
      %vm1722 = vcmask 7168
      %1723 = vst.msk [vmem:[%s276] sm:$0xff] %vm1722, %v1658
      %1724 = vst.msk [vmem:[%s276 + $0x8] sm:$0xff] %vm1722, %v1659
      %1725 = vst.msk [vmem:[%s276 + $0x10] sm:$0xff] %vm1722, %v1660
      %1726 = vst.msk [vmem:[%s276 + $0x18] sm:$0xff] %vm1722, %v1661
      %1727 = vst.msk [vmem:[%s276 + $0x20] sm:$0xff] %vm1722, %v1662
      %1728 = vst.msk [vmem:[%s276 + $0x28] sm:$0xff] %vm1722, %v1663
      %1729 = vst.msk [vmem:[%s276 + $0x30] sm:$0xff] %vm1722, %v1664
      %1730 = vst.msk [vmem:[%s276 + $0x38] sm:$0xff] %vm1722, %v1665
      %1731 = vst.msk [vmem:[%s276 + $0x40] sm:$0xff] %vm1722, %v1666
      %1732 = vst.msk [vmem:[%s276 + $0x48] sm:$0xff] %vm1722, %v1667
      %1733 = vst.msk [vmem:[%s276 + $0x50] sm:$0xff] %vm1722, %v1668
      %1734 = vst.msk [vmem:[%s276 + $0x58] sm:$0xff] %vm1722, %v1669
      %1735 = vst.msk [vmem:[%s276 + $0x60] sm:$0xff] %vm1722, %v1670
      %1736 = vst.msk [vmem:[%s276 + $0x68] sm:$0xff] %vm1722, %v1671
      %1737 = vst.msk [vmem:[%s276 + $0x70] sm:$0xff] %vm1722, %v1672
      %1738 = vst.msk [vmem:[%s276 + $0x78] sm:$0xff] %vm1722, %v1673
      %1739 = vst.msk [vmem:[%s276 + $0x80] sm:$0xff] %vm1722, %v1674
      %1740 = vst.msk [vmem:[%s276 + $0x88] sm:$0xff] %vm1722, %v1675
      %1741 = vst.msk [vmem:[%s276 + $0x90] sm:$0xff] %vm1722, %v1676
      %1742 = vst.msk [vmem:[%s276 + $0x98] sm:$0xff] %vm1722, %v1677
      %1743 = vst.msk [vmem:[%s276 + $0xa0] sm:$0xff] %vm1722, %v1678
      %1744 = vst.msk [vmem:[%s276 + $0xa8] sm:$0xff] %vm1722, %v1679
      %1745 = vst.msk [vmem:[%s276 + $0xb0] sm:$0xff] %vm1722, %v1680
      %1746 = vst.msk [vmem:[%s276 + $0xb8] sm:$0xff] %vm1722, %v1681
      %1747 = vst.msk [vmem:[%s276 + $0xc0] sm:$0xff] %vm1722, %v1682
      %1748 = vst.msk [vmem:[%s276 + $0xc8] sm:$0xff] %vm1722, %v1683
      %1749 = vst.msk [vmem:[%s276 + $0xd0] sm:$0xff] %vm1722, %v1684
      %1750 = vst.msk [vmem:[%s276 + $0xd8] sm:$0xff] %vm1722, %v1685
      %1751 = vst.msk [vmem:[%s276 + $0xe0] sm:$0xff] %vm1722, %v1686
      %1752 = vst.msk [vmem:[%s276 + $0xe8] sm:$0xff] %vm1722, %v1687
      %1753 = vst.msk [vmem:[%s276 + $0xf0] sm:$0xff] %vm1722, %v1688
      %1754 = vst.msk [vmem:[%s276 + $0xf8] sm:$0xff] %vm1722, %v1689
      %1755 = vst.msk [vmem:[%s276 + $0x100] sm:$0xff] %vm1722, %v1690
      %1756 = vst.msk [vmem:[%s276 + $0x108] sm:$0xff] %vm1722, %v1691
      %1757 = vst.msk [vmem:[%s276 + $0x110] sm:$0xff] %vm1722, %v1692
      %1758 = vst.msk [vmem:[%s276 + $0x118] sm:$0xff] %vm1722, %v1693
      %1759 = vst.msk [vmem:[%s276 + $0x120] sm:$0xff] %vm1722, %v1694
      %1760 = vst.msk [vmem:[%s276 + $0x128] sm:$0xff] %vm1722, %v1695
      %1761 = vst.msk [vmem:[%s276 + $0x130] sm:$0xff] %vm1722, %v1696
      %1762 = vst.msk [vmem:[%s276 + $0x138] sm:$0xff] %vm1722, %v1697
      %1763 = vst.msk [vmem:[%s276 + $0x140] sm:$0xff] %vm1722, %v1698
      %1764 = vst.msk [vmem:[%s276 + $0x148] sm:$0xff] %vm1722, %v1699
      %1765 = vst.msk [vmem:[%s276 + $0x150] sm:$0xff] %vm1722, %v1700
      %1766 = vst.msk [vmem:[%s276 + $0x158] sm:$0xff] %vm1722, %v1701
      %1767 = vst.msk [vmem:[%s276 + $0x160] sm:$0xff] %vm1722, %v1702
      %1768 = vst.msk [vmem:[%s276 + $0x168] sm:$0xff] %vm1722, %v1703
      %1769 = vst.msk [vmem:[%s276 + $0x170] sm:$0xff] %vm1722, %v1704
      %1770 = vst.msk [vmem:[%s276 + $0x178] sm:$0xff] %vm1722, %v1705
      %1771 = vst.msk [vmem:[%s276 + $0x180] sm:$0xff] %vm1722, %v1706
      %1772 = vst.msk [vmem:[%s276 + $0x188] sm:$0xff] %vm1722, %v1707
      %1773 = vst.msk [vmem:[%s276 + $0x190] sm:$0xff] %vm1722, %v1708
      %1774 = vst.msk [vmem:[%s276 + $0x198] sm:$0xff] %vm1722, %v1709
      %1775 = vst.msk [vmem:[%s276 + $0x1a0] sm:$0xff] %vm1722, %v1710
      %1776 = vst.msk [vmem:[%s276 + $0x1a8] sm:$0xff] %vm1722, %v1711
      %1777 = vst.msk [vmem:[%s276 + $0x1b0] sm:$0xff] %vm1722, %v1712
      %1778 = vst.msk [vmem:[%s276 + $0x1b8] sm:$0xff] %vm1722, %v1713
      %1779 = vst.msk [vmem:[%s276 + $0x1c0] sm:$0xff] %vm1722, %v1714
      %1780 = vst.msk [vmem:[%s276 + $0x1c8] sm:$0xff] %vm1722, %v1715
      %1781 = vst.msk [vmem:[%s276 + $0x1d0] sm:$0xff] %vm1722, %v1716
      %1782 = vst.msk [vmem:[%s276 + $0x1d8] sm:$0xff] %vm1722, %v1717
      %1783 = vst.msk [vmem:[%s276 + $0x1e0] sm:$0xff] %vm1722, %v1718
      %1784 = vst.msk [vmem:[%s276 + $0x1e8] sm:$0xff] %vm1722, %v1719
      %1785 = vst.msk [vmem:[%s276 + $0x1f0] sm:$0xff] %vm1722, %v1720
      %1786 = vst.msk [vmem:[%s276 + $0x1f8] sm:$0xff] %vm1722, %v1721
      %s1787 = smul.u32 64, %s18
      %p1788 = scmp.lt.s32.totalorder %s1787, 127
      %s1789 = scalar_select %p1788, %s1787, 127
      %s1790 = smul.addr %s1789, 8
      %s1791 = scalar_lea.vmem %s6, %s1790
      // Predicated region
      $region45: #{tpu_custom_call.1} parent=43 // pred_check
        %p1792 = pneg %p172
      $region46: #{tpu_custom_call.1} parent=43 // pred_check_branch
        %1794 = sbr.rel (%p1792) target = $region48
      $region47: #{tpu_custom_call.1} parent=43 // pred_region
        %s1795 = smul.u32 64, %s18
      $region48: #{tpu_custom_call.1} parent=43 // pred_fallthru
        _
    $region44: #{tpu_custom_call.1} parent=5 // pred_fallthru
      _
    %p1796 = scmp.le.s32.totalorder 2, %s13
    // Predicated region
    $region49: #{tpu_custom_call.1} parent=5 // pred_check
      %p1797 = pneg %p1796
    $region50: #{tpu_custom_call.1} parent=5 // pred_check_branch
      %1799 = sbr.rel (%p1797) target = $region52
    $region51: #{tpu_custom_call.1} parent=5 // pred_region
      %s1800 = ssub.s32 %s13, 2
      // Predicated region
      $region53: #{tpu_custom_call.1} parent=51 // pred_check
        %p1801 = pneg %p178
      $region54: #{tpu_custom_call.1} parent=51 // pred_check_branch
        %1803 = sbr.rel (%p1801) target = $region56
      $region55: #{tpu_custom_call.1} parent=51 // pred_region
        %s1804 = smul.u32 64, %s19
        %p1805 = scmp.lt.s32.totalorder %s1804, 127
        %s1806 = scalar_select %p1805, %s1804, 127
        %s1807 = smul.addr %s1806, 8
        %s1808 = scalar_lea.vmem %s6, %s1807
      $region56: #{tpu_custom_call.1} parent=51 // pred_fallthru
        _
    $region52: #{tpu_custom_call.1} parent=5 // pred_fallthru
      _
  $region6: #{tpu_custom_call.1} parent=0 // loop_footer
    %s17 = sadd.s32 1, %s13
  $region7: #{tpu_custom_call.1} parent=0 // loop_footer_branch
    %12 = sbr.rel target = $region3
  $region8: #{tpu_custom_call.1} parent=0 // loop_exit
    _

</llo_original>
